<compile_context>
chip_gen: v6e
topology: v6e:2x2x1
jax: 0.10.0
libtpu: 0.0.40
codegen_flags: <defaults>
</compile_context>

<pallas_src>
import functools

import jax
import jax.numpy as jnp
import numpy as np
from jax.experimental import pallas as pl
from jax.experimental.pallas import tpu as pltpu

EMB_DIM = 768      # camembert-base hidden size
NUM_FEAT = 100     # numerical feature count
NUM_PAD = 128      # numerical features zero-padded to a lane-aligned width
H1, H2 = 512, 256  # MLP hidden sizes
VOCAB = 1000       # synthetic vocab for the embedding stand-in


def _round_up(x, m):
    return ((x + m - 1) // m) * m


def _vmem_capacity_bytes():
    try:
        return int(pltpu.get_tpu_info().vmem_capacity_bytes)
    except Exception:
        return 64 << 20  # conservative default (v7x per-TC VMEM)


def engagement_kernel(text_ref, num_ref,
                      w1t_ref, w1n_ref, b1_ref,
                      w2_ref, b2_ref,
                      w3_ref, b3_ref,
                      out_ref, pooled_acc, *, inv_seq_len):
    s = pl.program_id(1)
    n_s = pl.num_programs(1)

    # --- mean pooling over the sequence axis (== torch.mean(x, dim=1)) ------
    # f32 accumulator in VMEM scratch; each grid step adds one sequence chunk.
    @pl.when(s == 0)
    def _init():
        pooled_acc[...] = jnp.zeros_like(pooled_acc)

    pooled_acc[...] += jnp.sum(text_ref[...], axis=1, dtype=jnp.float32)

    @pl.when(s == n_s - 1)
    def _finalize():
        pooled = (pooled_acc[...] * inv_seq_len).astype(jnp.bfloat16)   # [tb, 768]

        # Linear(868 -> 512): concat([pooled, num]) @ W1 == pooled@W1t + num@W1n
        h1 = (jnp.dot(pooled, w1t_ref[...], preferred_element_type=jnp.float32)
              + jnp.dot(num_ref[...], w1n_ref[...], preferred_element_type=jnp.float32)
              + b1_ref[...])                                            # [tb, 512] f32
        h1 = jnp.maximum(h1, 0.0)                                       # ReLU
        # Dropout(0.2): identity at inference time.

        # Linear(512 -> 256) + ReLU
        h2 = (jnp.dot(h1.astype(jnp.bfloat16), w2_ref[...],
                      preferred_element_type=jnp.float32)
              + b2_ref[...])                                            # [tb, 256] f32
        h2 = jnp.maximum(h2, 0.0)

        # Linear(256 -> 1): VPU broadcast-multiply + lane reduction, stored as
        # a lane-dense [1, tb] row.
        row = jnp.sum(h2 * w3_ref[...].astype(jnp.float32), axis=-1)    # [tb]
        out_ref[...] = (row[None, :] + b3_ref[...]).astype(out_ref.dtype)


def engagement_predict(text_features, numerical_features, params):
    """Fused mean-pool + concat-equivalent MLP head, tiled over batch x sequence."""
    B, S, D = text_features.shape
    assert D == EMB_DIM
    vmem_cap = _vmem_capacity_bytes()

    # --- bf16 weights (f32 biases); numerical rows of W1 zero-padded 100 -> 128.
    w1t, w1n, b1, w2, b2, w3, b3 = params
    w1n = jnp.pad(w1n, ((0, NUM_PAD - w1n.shape[0]), (0, 0)))
    w1t, w1n, w2, w3 = (w.astype(jnp.bfloat16) for w in (w1t, w1n, w2, w3))
    b1, b2, b3 = (b.astype(jnp.float32) for b in (b1, b2, b3))

    text = text_features.astype(jnp.bfloat16)
    num = jnp.pad(numerical_features,
                  ((0, 0), (0, NUM_PAD - numerical_features.shape[1]))
                  ).astype(jnp.bfloat16)

    # --- tiling: batch tile fixed (up to 256), sequence streamed in chunks ---
    tb = min(256, _round_up(B, 8))
    text_budget = int(0.40 * vmem_cap)                    # double-buffered text total
    ts_max = max(8, ((text_budget // 2) // (tb * EMB_DIM * 2) // 8) * 8)
    if S <= ts_max:
        ts = _round_up(S, 8)                              # single chunk (full S)
    else:
        ts = max(16, (ts_max // 16) * 16)                 # dense bf16 sublane packing
    s_pad = _round_up(S, ts)
    b_pad = _round_up(B, tb)

    if b_pad != B or s_pad != S:
        text = jnp.pad(text, ((0, b_pad - B), (0, s_pad - S), (0, 0)))
    if b_pad != B:
        num = jnp.pad(num, ((0, b_pad - B), (0, 0)))

    grid = (b_pad // tb, s_pad // ts)

    # --- VMEM footprint / generation-aware limit ------------------------------
    w_bytes = sum(int(np.prod(w.shape)) * w.dtype.itemsize
                  for w in (w1t, w1n, b1, w2, b2, w3, b3))
    footprint = (2 * tb * ts * EMB_DIM * 2     # text chunks (bf16, double-buffered)
                 + 2 * tb * NUM_PAD * 2        # numerical tiles
                 + w_bytes                     # weights (single-buffered, resident)
                 + 2 * tb * 4                  # output rows
                 + tb * EMB_DIM * 4)           # f32 pooled accumulator scratch
    vmem_limit = int(min(max(int(1.25 * footprint) + (4 << 20), 16 << 20),
                         0.75 * vmem_cap))

    flops = 2 * b_pad * (s_pad * EMB_DIM
                         + EMB_DIM * H1 + NUM_PAD * H1 + H1 * H2 + H2)
    bytes_accessed = (b_pad * s_pad * EMB_DIM * 2 + b_pad * NUM_PAD * 2
                      + w_bytes + b_pad * 4)

    const = lambda i, s: (0, 0)
    wspec = lambda shape: pl.BlockSpec(shape, const, pipeline_mode=pl.Buffered(1))

    out = pl.pallas_call(
        functools.partial(engagement_kernel, inv_seq_len=1.0 / S),
        out_shape=jax.ShapeDtypeStruct((1, b_pad), jnp.float32),
        grid=grid,
        in_specs=[
            pl.BlockSpec((tb, ts, EMB_DIM), lambda i, s: (i, s, 0)),   # text chunk
            pl.BlockSpec((tb, NUM_PAD), lambda i, s: (i, 0)),          # numerical tile
            wspec((EMB_DIM, H1)),                                      # resident weights
            wspec((NUM_PAD, H1)),
            wspec((1, H1)),
            wspec((H1, H2)),
            wspec((1, H2)),
            wspec((1, H2)),                                            # w3 row [1, 256]
            wspec((1, 1)),
        ],
        out_specs=pl.BlockSpec((1, tb), lambda i, s: (0, i)),          # lane-dense row
        scratch_shapes=[pltpu.VMEM((tb, EMB_DIM), jnp.float32)],       # pooled accum
        compiler_params=pltpu.CompilerParams(
            dimension_semantics=("parallel", "arbitrary"),
            vmem_limit_bytes=vmem_limit),
        cost_estimate=pl.CostEstimate(flops=flops, transcendentals=0,
                                      bytes_accessed=bytes_accessed),
    )(text, num, w1t, w1n, b1, w2, b2, w3, b3)

    return out.reshape(-1)[:B, None]


def engagement_reference(text_features, numerical_features, params):
    """Pure-JAX f32 reference mirroring the torch forward (eval mode)."""
    w1t, w1n, b1, w2, b2, w3, b3 = params
    pooled = jnp.mean(text_features, axis=1)
    h1 = jnp.maximum(pooled @ w1t + numerical_features @ w1n + b1, 0.0)
    h2 = jnp.maximum(h1 @ w2 + b2, 0.0)
    return h2 @ w3.T + b3


def init_params(key):
    """Deterministic synthetic weights with the shapes the module implies."""
    ks = jax.random.split(key, 8)
    scale = 0.02
    w1t = scale * jax.random.normal(ks[0], (EMB_DIM, H1), jnp.float32)   # top 768 rows of W1
    w1n = scale * jax.random.normal(ks[1], (NUM_FEAT, H1), jnp.float32)  # bottom 100 rows
    b1 = scale * jax.random.normal(ks[2], (1, H1), jnp.float32)
    w2 = scale * jax.random.normal(ks[3], (H1, H2), jnp.float32)
    b2 = scale * jax.random.normal(ks[4], (1, H2), jnp.float32)
    w3 = scale * jax.random.normal(ks[5], (1, H2), jnp.float32)          # torch Linear(256,1) weight
    b3 = scale * jax.random.normal(ks[6], (1, 1), jnp.float32)
    emb_table = scale * jax.random.normal(ks[7], (VOCAB, EMB_DIM), jnp.float32)
    return (w1t, w1n, b1, w2, b2, w3, b3), emb_table


if __name__ == "__main__":
    key = jax.random.PRNGKey(0)
    k_par, k_ids, k_num = jax.random.split(key, 3)

    B, S = 2, 8
    params, emb_table = init_params(k_par)

    # Synthetic inputs matching the module's forward signature.
    text_ids = jax.random.randint(k_ids, (B, S), 0, VOCAB, dtype=jnp.int32)
    attention_mask = jnp.ones((B, S), dtype=jnp.int32)
    numerical_features = jax.random.normal(k_num, (B, NUM_FEAT), jnp.float32)

    # TODO(synk): the camembert-base transformer (self.bert) has no clean Pallas
    # equivalent here; stand in with a deterministic embedding lookup producing
    # the same [B, S, 768] shape as bert(text_ids, attention_mask)[0].
    text_features = emb_table[text_ids]          # [B, S, 768], plain-JAX glue
    _ = attention_mask                           # consumed only by the (absent) BERT

    out = jax.block_until_ready(
        engagement_predict(text_features, numerical_features, params))
    ref = jax.block_until_ready(
        engagement_reference(text_features, numerical_features, params))

    assert out.shape == (B, 1) and out.dtype == jnp.float32
    assert np.all(np.isfinite(np.asarray(out)))
    # bf16 operands / f32 accumulation vs f32 reference -> loose tolerance.
    assert np.allclose(np.asarray(out), np.asarray(ref), rtol=1e-1, atol=1e-2)
    print("KERNEL_OK")
</pallas_src>

<mosaic_0001>
module attributes {stable_mosaic.version = 11 : i64} {
  func.func @engagement_kernel(%arg0: i32, %arg1: i32, %arg2: memref<8x8x768xbf16, #tpu.memory_space<vmem>>, %arg3: memref<8x128xbf16, #tpu.memory_space<vmem>>, %arg4: memref<768x512xbf16, #tpu.memory_space<vmem>>, %arg5: memref<128x512xbf16, #tpu.memory_space<vmem>>, %arg6: memref<1x512xf32, #tpu.memory_space<vmem>>, %arg7: memref<512x256xbf16, #tpu.memory_space<vmem>>, %arg8: memref<1x256xf32, #tpu.memory_space<vmem>>, %arg9: memref<1x256xbf16, #tpu.memory_space<vmem>>, %arg10: memref<1x1xf32, #tpu.memory_space<vmem>>, %arg11: memref<1x8xf32, #tpu.memory_space<vmem>>, %arg12: memref<8x768xf32, #tpu.memory_space<vmem>>) attributes {dimension_semantics = [#tpu.dimension_semantics<parallel>, #tpu.dimension_semantics<arbitrary>], iteration_bounds = array<i64: 1, 1>, scalar_prefetch = 0 : i64, scratch_operands = 1 : i64, tpu.core_type = #tpu.core_type<tc>, window_params = [{transform_indices = @transform_0, window_bounds = array<i64: 8, 8, 768>}, {transform_indices = @transform_1, window_bounds = array<i64: 8, 128>}, {pipeline_mode = #tpu.pipeline_mode<synchronous>, transform_indices = @transform_2, window_bounds = array<i64: 768, 512>}, {pipeline_mode = #tpu.pipeline_mode<synchronous>, transform_indices = @transform_3, window_bounds = array<i64: 128, 512>}, {pipeline_mode = #tpu.pipeline_mode<synchronous>, transform_indices = @transform_4, window_bounds = array<i64: 1, 512>}, {pipeline_mode = #tpu.pipeline_mode<synchronous>, transform_indices = @transform_5, window_bounds = array<i64: 512, 256>}, {pipeline_mode = #tpu.pipeline_mode<synchronous>, transform_indices = @transform_6, window_bounds = array<i64: 1, 256>}, {pipeline_mode = #tpu.pipeline_mode<synchronous>, transform_indices = @transform_7, window_bounds = array<i64: 1, 256>}, {pipeline_mode = #tpu.pipeline_mode<synchronous>, transform_indices = @transform_8, window_bounds = array<i64: 1, 1>}, {transform_indices = @transform_9, window_bounds = array<i64: 1, 8>}]} {
    %c0_i32 = arith.constant 0 : i32
    %0 = arith.cmpi eq, %arg1, %c0_i32 : i32
    %1 = arith.extui %0 : i1 to i32
    %c0_i32_0 = arith.constant 0 : i32
    %2 = arith.cmpi ne, %1, %c0_i32_0 : i32
    scf.if %2 {
      %cst_9 = arith.constant 0.000000e+00 : f32
      %12 = vector.broadcast %cst_9 : f32 to vector<8x768xf32>
      %c0_10 = arith.constant 0 : index
      %c0_11 = arith.constant 0 : index
      %13 = vector.load %arg12[%c0_10, %c0_11] : memref<8x768xf32, #tpu.memory_space<vmem>>, vector<8x768xf32>
      tpu.vector_store %arg12[%c0_10, %c0_11], %12 {strides = array<i32>} : memref<8x768xf32, #tpu.memory_space<vmem>>, vector<8x768xf32>,
    } else {
    }
    %c0 = arith.constant 0 : index
    %c0_1 = arith.constant 0 : index
    %3 = vector.load %arg12[%c0, %c0_1] : memref<8x768xf32, #tpu.memory_space<vmem>>, vector<8x768xf32>
    %c0_2 = arith.constant 0 : index
    %c0_3 = arith.constant 0 : index
    %c0_4 = arith.constant 0 : index
    %4 = vector.load %arg2[%c0_2, %c0_3, %c0_4] : memref<8x8x768xbf16, #tpu.memory_space<vmem>>, vector<8x8x768xbf16>
    %5 = arith.extf %4 : vector<8x8x768xbf16> to vector<8x8x768xf32>
    %cst = arith.constant dense<0.000000e+00> : vector<8x768xf32>
    %6 = vector.multi_reduction <add>, %5, %cst [1] : vector<8x8x768xf32> to vector<8x768xf32>
    %7 = arith.addf %3, %6 : vector<8x768xf32>
    %c0_5 = arith.constant 0 : index
    %c0_6 = arith.constant 0 : index
    %8 = vector.load %arg12[%c0_5, %c0_6] : memref<8x768xf32, #tpu.memory_space<vmem>>, vector<8x768xf32>
    tpu.vector_store %arg12[%c0_5, %c0_6], %7 {strides = array<i32>} : memref<8x768xf32, #tpu.memory_space<vmem>>, vector<8x768xf32>,
    %c0_i32_7 = arith.constant 0 : i32
    %9 = arith.cmpi eq, %arg1, %c0_i32_7 : i32
    %10 = arith.extui %9 : i1 to i32
    %c0_i32_8 = arith.constant 0 : i32
    %11 = arith.cmpi ne, %10, %c0_i32_8 : i32
    scf.if %11 {
      %c0_9 = arith.constant 0 : index
      %c0_10 = arith.constant 0 : index
      %12 = vector.load %arg12[%c0_9, %c0_10] : memref<8x768xf32, #tpu.memory_space<vmem>>, vector<8x768xf32>
      %cst_11 = arith.constant 1.250000e-01 : f32
      %13 = vector.broadcast %cst_11 : f32 to vector<8x768xf32>
      %14 = arith.mulf %12, %13 : vector<8x768xf32>
      %15 = arith.truncf %14 : vector<8x768xf32> to vector<8x768xbf16>
      %c0_12 = arith.constant 0 : index
      %c0_13 = arith.constant 0 : index
      %16 = vector.load %arg4[%c0_12, %c0_13] : memref<768x512xbf16, #tpu.memory_space<vmem>>, vector<768x512xbf16>
      %cst_14 = arith.constant dense<0.000000e+00> : vector<8x512xf32>
      %17 = tpu.matmul %15, %16, %cst_14 {dimension_numbers = #tpu.dot_dimension_numbers<[1], [0], [0], [1], [0, 0, 1, 1], [], []>} : vector<8x768xbf16>, vector<768x512xbf16>, vector<8x512xf32> -> vector<8x512xf32>
      %c0_15 = arith.constant 0 : index
      %c0_16 = arith.constant 0 : index
      %18 = vector.load %arg3[%c0_15, %c0_16] : memref<8x128xbf16, #tpu.memory_space<vmem>>, vector<8x128xbf16>
      %c0_17 = arith.constant 0 : index
      %c0_18 = arith.constant 0 : index
      %19 = vector.load %arg5[%c0_17, %c0_18] : memref<128x512xbf16, #tpu.memory_space<vmem>>, vector<128x512xbf16>
      %cst_19 = arith.constant dense<0.000000e+00> : vector<8x512xf32>
      %20 = tpu.matmul %18, %19, %cst_19 {dimension_numbers = #tpu.dot_dimension_numbers<[1], [0], [0], [1], [0, 0, 1, 1], [], []>} : vector<8x128xbf16>, vector<128x512xbf16>, vector<8x512xf32> -> vector<8x512xf32>
      %21 = arith.addf %17, %20 : vector<8x512xf32>
      %c0_20 = arith.constant 0 : index
      %c0_21 = arith.constant 0 : index
      %22 = vector.load %arg6[%c0_20, %c0_21] : memref<1x512xf32, #tpu.memory_space<vmem>>, vector<1x512xf32>
      %23 = vector.broadcast %22 : vector<1x512xf32> to vector<8x512xf32>
      %24 = arith.addf %21, %23 : vector<8x512xf32>
      %cst_22 = arith.constant 0.000000e+00 : f32
      %25 = vector.broadcast %cst_22 : f32 to vector<8x512xf32>
      %26 = arith.maximumf %24, %25 : vector<8x512xf32>
      %27 = arith.truncf %26 : vector<8x512xf32> to vector<8x512xbf16>
      %c0_23 = arith.constant 0 : index
      %c0_24 = arith.constant 0 : index
      %28 = vector.load %arg7[%c0_23, %c0_24] : memref<512x256xbf16, #tpu.memory_space<vmem>>, vector<512x256xbf16>
      %cst_25 = arith.constant dense<0.000000e+00> : vector<8x256xf32>
      %29 = tpu.matmul %27, %28, %cst_25 {dimension_numbers = #tpu.dot_dimension_numbers<[1], [0], [0], [1], [0, 0, 1, 1], [], []>} : vector<8x512xbf16>, vector<512x256xbf16>, vector<8x256xf32> -> vector<8x256xf32>
      %c0_26 = arith.constant 0 : index
      %c0_27 = arith.constant 0 : index
      %30 = vector.load %arg8[%c0_26, %c0_27] : memref<1x256xf32, #tpu.memory_space<vmem>>, vector<1x256xf32>
      %31 = vector.broadcast %30 : vector<1x256xf32> to vector<8x256xf32>
      %32 = arith.addf %29, %31 : vector<8x256xf32>
      %cst_28 = arith.constant 0.000000e+00 : f32
      %33 = vector.broadcast %cst_28 : f32 to vector<8x256xf32>
      %34 = arith.maximumf %32, %33 : vector<8x256xf32>
      %c0_29 = arith.constant 0 : index
      %c0_30 = arith.constant 0 : index
      %35 = vector.load %arg9[%c0_29, %c0_30] : memref<1x256xbf16, #tpu.memory_space<vmem>>, vector<1x256xbf16>
      %36 = arith.extf %35 : vector<1x256xbf16> to vector<1x256xf32>
      %37 = vector.broadcast %36 : vector<1x256xf32> to vector<8x256xf32>
      %38 = arith.mulf %34, %37 : vector<8x256xf32>
      %cst_31 = arith.constant dense<0.000000e+00> : vector<8xf32>
      %39 = vector.multi_reduction <add>, %38, %cst_31 [1] : vector<8x256xf32> to vector<8xf32>
      %40 = vector.shape_cast %39 : vector<8xf32> to vector<1x8xf32>
      %c0_32 = arith.constant 0 : index
      %c0_33 = arith.constant 0 : index
      %41 = vector.load %arg10[%c0_32, %c0_33] : memref<1x1xf32, #tpu.memory_space<vmem>>, vector<1x1xf32>
      %42 = vector.broadcast %41 : vector<1x1xf32> to vector<1x8xf32>
      %43 = arith.addf %40, %42 : vector<1x8xf32>
      %c0_34 = arith.constant 0 : index
      %c0_35 = arith.constant 0 : index
      %44 = vector.load %arg11[%c0_34, %c0_35] : memref<1x8xf32, #tpu.memory_space<vmem>>, vector<1x8xf32>
      tpu.vector_store %arg11[%c0_34, %c0_35], %43 {strides = array<i32>} : memref<1x8xf32, #tpu.memory_space<vmem>>, vector<1x8xf32>,
    } else {
    }
    return
  }
  func.func @transform_0(%arg0: i32, %arg1: i32) -> (i32, i32, i32) {
    %c0_i32 = arith.constant 0 : i32
    %c0_i32_0 = arith.constant 0 : i32
    return %arg0, %arg1, %c0_i32 : i32, i32, i32
  }
  func.func @transform_1(%arg0: i32, %arg1: i32) -> (i32, i32) {
    %c0_i32 = arith.constant 0 : i32
    %c0_i32_0 = arith.constant 0 : i32
    return %arg0, %c0_i32 : i32, i32
  }
  func.func @transform_2(%arg0: i32, %arg1: i32) -> (i32, i32) {
    %c0_i32 = arith.constant 0 : i32
    %c0_i32_0 = arith.constant 0 : i32
    %c0_i32_1 = arith.constant 0 : i32
    return %c0_i32, %c0_i32_0 : i32, i32
  }
  func.func @transform_3(%arg0: i32, %arg1: i32) -> (i32, i32) {
    %c0_i32 = arith.constant 0 : i32
    %c0_i32_0 = arith.constant 0 : i32
    %c0_i32_1 = arith.constant 0 : i32
    return %c0_i32, %c0_i32_0 : i32, i32
  }
  func.func @transform_4(%arg0: i32, %arg1: i32) -> (i32, i32) {
    %c0_i32 = arith.constant 0 : i32
    %c0_i32_0 = arith.constant 0 : i32
    %c0_i32_1 = arith.constant 0 : i32
    return %c0_i32, %c0_i32_0 : i32, i32
  }
  func.func @transform_5(%arg0: i32, %arg1: i32) -> (i32, i32) {
    %c0_i32 = arith.constant 0 : i32
    %c0_i32_0 = arith.constant 0 : i32
    %c0_i32_1 = arith.constant 0 : i32
    return %c0_i32, %c0_i32_0 : i32, i32
  }
  func.func @transform_6(%arg0: i32, %arg1: i32) -> (i32, i32) {
    %c0_i32 = arith.constant 0 : i32
    %c0_i32_0 = arith.constant 0 : i32
    %c0_i32_1 = arith.constant 0 : i32
    return %c0_i32, %c0_i32_0 : i32, i32
  }
  func.func @transform_7(%arg0: i32, %arg1: i32) -> (i32, i32) {
    %c0_i32 = arith.constant 0 : i32
    %c0_i32_0 = arith.constant 0 : i32
    %c0_i32_1 = arith.constant 0 : i32
    return %c0_i32, %c0_i32_0 : i32, i32
  }
  func.func @transform_8(%arg0: i32, %arg1: i32) -> (i32, i32) {
    %c0_i32 = arith.constant 0 : i32
    %c0_i32_0 = arith.constant 0 : i32
    %c0_i32_1 = arith.constant 0 : i32
    return %c0_i32, %c0_i32_0 : i32, i32
  }
  func.func @transform_9(%arg0: i32, %arg1: i32) -> (i32, i32) {
    %c0_i32 = arith.constant 0 : i32
    %c0_i32_0 = arith.constant 0 : i32
    return %c0_i32, %arg0 : i32, i32
  }
}

</mosaic_0001>

<llo_original>
// kernel: tpu_custom_call.1
$region0: #{tpu_custom_call.1}
  #allocation0 [shape = 'u32[]', space=smem, size = 0x4, offset = 0x4, fixed_abs, tag = 'smem constant byte address 0x4 - core index']
  #allocation1 [shape = 'u32[144,128]{1,0:T(1,128)}', space=vmem, size = 0x12000, scoped, tag = 'internal scratch']
  #allocation2 [shape = 'f32[8,768]{1,0:T(8,128)}', space=vmem, size = 0x6000, scoped, tag = 'scratch operand']
  #allocation3 [shape = 'f32[1,1]{1,0:T(1,128)S(1)}', space=vmem, size = 0x200, scoped, tag = 'scoped memory for tpu_custom_call.1']
  %s0 = inlined_call_operand.hbm [shape: bf16[8,8,768], index: 0, kind: input, shape index: {}]
  %s1 = inlined_call_operand.hbm [shape: bf16[8,128], index: 1, kind: input, shape index: {}]
  %s2 = inlined_call_operand.hbm [shape: bf16[768,512], index: 2, kind: input, shape index: {}]
  %s3 = inlined_call_operand.hbm [shape: bf16[128,512], index: 3, kind: input, shape index: {}]
  %s4 = inlined_call_operand.vmem [shape: f32[1,512], index: 4, kind: input, shape index: {}]
  %s5 = inlined_call_operand.hbm [shape: bf16[512,256], index: 5, kind: input, shape index: {}]
  %s6 = inlined_call_operand.vmem [shape: f32[1,256], index: 6, kind: input, shape index: {}]
  %s7 = inlined_call_operand.vmem [shape: bf16[1,256], index: 7, kind: input, shape index: {}]
  %s8 = inlined_call_operand.<no memory space> [shape: f32[1,1], index: 8, kind: input, shape index: {}]
  %s9 = inlined_call_operand.hbm [shape: f32[1,8], index: 9, kind: output, shape index: {}]
  %s10 = sld [smem:[#allocation0]]
  $region74: #{tpu_custom_call.1} parent=0
    _
  %s12 = ssub.s32 1, %s10
  %s13 = scalar_select 0, %s12, %s10
  %v14 = vstv %s8
  %15 = vst [vmem:[#allocation3] sm:$0x1] %v14
  $region1: #{tpu_custom_call.1} parent=0
    #allocation4 [shape = 'u8[98304]{0}', space=vmem, size = 0x18000, scoped, tag = 'input window, operand 0, single buffered']
    #allocation5 [shape = 's32[1]{0}', space=sflag, size = 0x4, scoped, tag = 'scoped memory for tpu_custom_call.1']
    #allocation6 [shape = 's32[1]{0}', space=sflag, size = 0x4, scoped, tag = 'scoped memory for tpu_custom_call.1']
    #allocation7 [shape = 'u8[2048]{0}', space=vmem, size = 0x800, scoped, tag = 'input window, operand 1, single buffered']
    #allocation8 [shape = 's32[1]{0}', space=sflag, size = 0x4, scoped, tag = 'scoped memory for tpu_custom_call.1']
    #allocation9 [shape = 'u8[786432]{0}', space=vmem, size = 0xc0000, scoped, tag = 'input window, operand 2, single buffered']
    #allocation10 [shape = 'u8[131072]{0}', space=vmem, size = 0x20000, scoped, tag = 'input window, operand 3, single buffered']
    #allocation11 [shape = 's32[1]{0}', space=sflag, size = 0x4, scoped, tag = 'scoped memory for tpu_custom_call.1']
    #allocation12 [shape = 'u8[262144]{0}', space=vmem, size = 0x40000, scoped, tag = 'input window, operand 5, single buffered']
    #allocation13 [shape = 'u8[512]{0}', space=vmem, size = 0x400, scoped, tag = 'output window, operand 0, single buffered']
    %16 = vsyncpa [#allocation5], 0
    %17 = vsyncpa [#allocation8], 0
    %18 = vsyncpa [#allocation11], 0
    %19 = vsyncpa [#allocation6], 0
    // Predicated region
    $region2: #{tpu_custom_call.1} parent=1 // pred_check
      _
    $region3: #{tpu_custom_call.1} parent=1 // pred_check_branch
      %21 = sbr.rel (0) target = $region5
    $region4: #{tpu_custom_call.1} parent=1 // pred_region
      %s23 = ssub.s32 3072, 3072
      %24 = vsyncadd [#allocation5], %s23
      %s25 = sshll.u32 [#allocation4], 4
      %s26 = int_to_ptr.vmem [resolvable:$true] %s25
      %31 = dma.hbm_to_vmem [thread:$0]  %s0, 3072, %s26, [#allocation5], 384, 384, 24
    $region5: #{tpu_custom_call.1} parent=1 // pred_fallthru
      _
    // Predicated region
    $region6: #{tpu_custom_call.1} parent=1 // pred_check
      _
    $region7: #{tpu_custom_call.1} parent=1 // pred_check_branch
      %33 = sbr.rel (0) target = $region9
    $region8: #{tpu_custom_call.1} parent=1 // pred_region
      %s35 = ssub.s32 64, 64
      %36 = vsyncadd [#allocation8], %s35
      %s38 = sshll.u32 [#allocation7], 4
      %s39 = int_to_ptr.vmem [resolvable:$true] %s38
      %41 = dma.hbm_to_vmem [thread:$0]  %s1, 64, %s39, [#allocation8]
    $region9: #{tpu_custom_call.1} parent=1 // pred_fallthru
      _
    // Predicated region
    $region10: #{tpu_custom_call.1} parent=1 // pred_check
      _
    $region11: #{tpu_custom_call.1} parent=1 // pred_check_branch
      %43 = sbr.rel (0) target = $region13
    $region12: #{tpu_custom_call.1} parent=1 // pred_region
      %s45 = ssub.s32 24576, 24576
      %46 = vsyncadd [#allocation8], %s45
      %s47 = sshll.u32 [#allocation9], 4
      %s48 = int_to_ptr.vmem [resolvable:$true] %s47
      %53 = dma.hbm_to_vmem [thread:$0]  %s2, 24576, %s48, [#allocation8], 256, 256, 16
    $region13: #{tpu_custom_call.1} parent=1 // pred_fallthru
      _
    // Predicated region
    $region14: #{tpu_custom_call.1} parent=1 // pred_check
      _
    $region15: #{tpu_custom_call.1} parent=1 // pred_check_branch
      %55 = sbr.rel (0) target = $region17
    $region16: #{tpu_custom_call.1} parent=1 // pred_region
      %s57 = ssub.s32 4096, 4096
      %58 = vsyncadd [#allocation11], %s57
      %s59 = sshll.u32 [#allocation10], 4
      %s60 = int_to_ptr.vmem [resolvable:$true] %s59
      %65 = dma.hbm_to_vmem [thread:$0]  %s3, 4096, %s60, [#allocation11], 256, 256, 16
    $region17: #{tpu_custom_call.1} parent=1 // pred_fallthru
      _
    // Predicated region
    $region18: #{tpu_custom_call.1} parent=1 // pred_check
      _
    $region19: #{tpu_custom_call.1} parent=1 // pred_check_branch
      %67 = sbr.rel (0) target = $region21
    $region20: #{tpu_custom_call.1} parent=1 // pred_region
      _
    $region21: #{tpu_custom_call.1} parent=1 // pred_fallthru
      _
    // Predicated region
    $region22: #{tpu_custom_call.1} parent=1 // pred_check
      _
    $region23: #{tpu_custom_call.1} parent=1 // pred_check_branch
      %69 = sbr.rel (0) target = $region25
    $region24: #{tpu_custom_call.1} parent=1 // pred_region
      %s71 = ssub.s32 8192, 8192
      %72 = vsyncadd [#allocation11], %s71
      %s73 = sshll.u32 [#allocation12], 4
      %s74 = int_to_ptr.vmem [resolvable:$true] %s73
      %79 = dma.hbm_to_vmem [thread:$0]  %s5, 8192, %s74, [#allocation11], 128, 128, 8
    $region25: #{tpu_custom_call.1} parent=1 // pred_fallthru
      _
    // Predicated region
    $region26: #{tpu_custom_call.1} parent=1 // pred_check
      _
    $region27: #{tpu_custom_call.1} parent=1 // pred_check_branch
      %81 = sbr.rel (0) target = $region29
    $region28: #{tpu_custom_call.1} parent=1 // pred_region
      _
    $region29: #{tpu_custom_call.1} parent=1 // pred_fallthru
      _
    // Predicated region
    $region30: #{tpu_custom_call.1} parent=1 // pred_check
      _
    $region31: #{tpu_custom_call.1} parent=1 // pred_check_branch
      %83 = sbr.rel (0) target = $region33
    $region32: #{tpu_custom_call.1} parent=1 // pred_region
      _
    $region33: #{tpu_custom_call.1} parent=1 // pred_fallthru
      _
    // Predicated region
    $region34: #{tpu_custom_call.1} parent=1 // pred_check
      _
    $region35: #{tpu_custom_call.1} parent=1 // pred_check_branch
      %85 = sbr.rel (0) target = $region37
    $region36: #{tpu_custom_call.1} parent=1 // pred_region
      _
    $region37: #{tpu_custom_call.1} parent=1 // pred_fallthru
      _
    // Predicated region
    $region38: #{tpu_custom_call.1} parent=1 // pred_check
      _
    $region39: #{tpu_custom_call.1} parent=1 // pred_check_branch
      %87 = sbr.rel (0) target = $region41
    $region40: #{tpu_custom_call.1} parent=1 // pred_region
      %88 = dma.done [#allocation5], 3072
    $region41: #{tpu_custom_call.1} parent=1 // pred_fallthru
      _
    // Predicated region
    $region42: #{tpu_custom_call.1} parent=1 // pred_check
      _
    $region43: #{tpu_custom_call.1} parent=1 // pred_check_branch
      %90 = sbr.rel (0) target = $region45
    $region44: #{tpu_custom_call.1} parent=1 // pred_region
      %91 = dma.done [#allocation8], 64
    $region45: #{tpu_custom_call.1} parent=1 // pred_fallthru
      _
    // Predicated region
    $region46: #{tpu_custom_call.1} parent=1 // pred_check
      _
    $region47: #{tpu_custom_call.1} parent=1 // pred_check_branch
      %93 = sbr.rel (0) target = $region49
    $region48: #{tpu_custom_call.1} parent=1 // pred_region
      %94 = dma.done [#allocation8], 24576
    $region49: #{tpu_custom_call.1} parent=1 // pred_fallthru
      _
    // Predicated region
    $region50: #{tpu_custom_call.1} parent=1 // pred_check
      _
    $region51: #{tpu_custom_call.1} parent=1 // pred_check_branch
      %96 = sbr.rel (0) target = $region53
    $region52: #{tpu_custom_call.1} parent=1 // pred_region
      %97 = dma.done [#allocation11], 4096
    $region53: #{tpu_custom_call.1} parent=1 // pred_fallthru
      _
    // Predicated region
    $region54: #{tpu_custom_call.1} parent=1 // pred_check
      _
    $region55: #{tpu_custom_call.1} parent=1 // pred_check_branch
      %99 = sbr.rel (0) target = $region57
    $region56: #{tpu_custom_call.1} parent=1 // pred_region
      %100 = dma.done [#allocation11], 8192
    $region57: #{tpu_custom_call.1} parent=1 // pred_fallthru
      _
    %p102 = scmp.eq.s32.totalorder 0, 0
    // Predicated region
    $region58: #{tpu_custom_call.1} parent=1 // pred_check
      %p103 = pneg %p102
    $region59: #{tpu_custom_call.1} parent=1 // pred_check_branch
      %105 = sbr.rel (%p103) target = $region61
    $region60: #{tpu_custom_call.1} parent=1 // pred_region
      %106 = vst [vmem:[#allocation2] sm:$0xff] 0.0
      %107 = vst [vmem:[#allocation2 + $0x8] sm:$0xff] 0.0
      %108 = vst [vmem:[#allocation2 + $0x10] sm:$0xff] 0.0
      %109 = vst [vmem:[#allocation2 + $0x18] sm:$0xff] 0.0
      %110 = vst [vmem:[#allocation2 + $0x20] sm:$0xff] 0.0
      %111 = vst [vmem:[#allocation2 + $0x28] sm:$0xff] 0.0
    $region61: #{tpu_custom_call.1} parent=1 // pred_fallthru
      _
    %v112 = vld [vmem:[#allocation2] sm:$0xff]
    %v113 = vld [vmem:[#allocation2 + $0x8] sm:$0xff]
    %v114 = vld [vmem:[#allocation2 + $0x10] sm:$0xff]
    %v115 = vld [vmem:[#allocation2 + $0x18] sm:$0xff]
    %v116 = vld [vmem:[#allocation2 + $0x20] sm:$0xff]
    %v117 = vld [vmem:[#allocation2 + $0x28] sm:$0xff]
    %v118 = vld [vmem:[#allocation4] sm:$0xff]
    %v119 = vld [vmem:[#allocation4 + $0x8] sm:$0xff]
    %v120 = vld [vmem:[#allocation4 + $0x10] sm:$0xff]
    %v121 = vld [vmem:[#allocation4 + $0x18] sm:$0xff]
    %v122 = vld [vmem:[#allocation4 + $0x20] sm:$0xff]
    %v123 = vld [vmem:[#allocation4 + $0x28] sm:$0xff]
    %v124 = vld [vmem:[#allocation4 + $0x30] sm:$0xff]
    %v125 = vld [vmem:[#allocation4 + $0x38] sm:$0xff]
    %v126 = vld [vmem:[#allocation4 + $0x40] sm:$0xff]
    %v127 = vld [vmem:[#allocation4 + $0x48] sm:$0xff]
    %v128 = vld [vmem:[#allocation4 + $0x50] sm:$0xff]
    %v129 = vld [vmem:[#allocation4 + $0x58] sm:$0xff]
    %v130 = vld [vmem:[#allocation4 + $0x60] sm:$0xff]
    %v131 = vld [vmem:[#allocation4 + $0x68] sm:$0xff]
    %v132 = vld [vmem:[#allocation4 + $0x70] sm:$0xff]
    %v133 = vld [vmem:[#allocation4 + $0x78] sm:$0xff]
    %v134 = vld [vmem:[#allocation4 + $0x80] sm:$0xff]
    %v135 = vld [vmem:[#allocation4 + $0x88] sm:$0xff]
    %v136 = vld [vmem:[#allocation4 + $0x90] sm:$0xff]
    %v137 = vld [vmem:[#allocation4 + $0x98] sm:$0xff]
    %v138 = vld [vmem:[#allocation4 + $0xa0] sm:$0xff]
    %v139 = vld [vmem:[#allocation4 + $0xa8] sm:$0xff]
    %v140 = vld [vmem:[#allocation4 + $0xb0] sm:$0xff]
    %v141 = vld [vmem:[#allocation4 + $0xb8] sm:$0xff]
    %v142 = vunpack.c.l.bf16 %v118
    %v143 = vunpack.c.h.bf16 %v118
    %v144 = vunpack.c.l.bf16 %v119
    %v145 = vunpack.c.h.bf16 %v119
    %v146 = vunpack.c.l.bf16 %v120
    %v147 = vunpack.c.h.bf16 %v120
    %v148 = vunpack.c.l.bf16 %v121
    %v149 = vunpack.c.h.bf16 %v121
    %v150 = vunpack.c.l.bf16 %v122
    %v151 = vunpack.c.h.bf16 %v122
    %v152 = vunpack.c.l.bf16 %v123
    %v153 = vunpack.c.h.bf16 %v123
    %v154 = vunpack.c.l.bf16 %v124
    %v155 = vunpack.c.h.bf16 %v124
    %v156 = vunpack.c.l.bf16 %v125
    %v157 = vunpack.c.h.bf16 %v125
    %v158 = vunpack.c.l.bf16 %v126
    %v159 = vunpack.c.h.bf16 %v126
    %v160 = vunpack.c.l.bf16 %v127
    %v161 = vunpack.c.h.bf16 %v127
    %v162 = vunpack.c.l.bf16 %v128
    %v163 = vunpack.c.h.bf16 %v128
    %v164 = vunpack.c.l.bf16 %v129
    %v165 = vunpack.c.h.bf16 %v129
    %v166 = vunpack.c.l.bf16 %v130
    %v167 = vunpack.c.h.bf16 %v130
    %v168 = vunpack.c.l.bf16 %v131
    %v169 = vunpack.c.h.bf16 %v131
    %v170 = vunpack.c.l.bf16 %v132
    %v171 = vunpack.c.h.bf16 %v132
    %v172 = vunpack.c.l.bf16 %v133
    %v173 = vunpack.c.h.bf16 %v133
    %v174 = vunpack.c.l.bf16 %v134
    %v175 = vunpack.c.h.bf16 %v134
    %v176 = vunpack.c.l.bf16 %v135
    %v177 = vunpack.c.h.bf16 %v135
    %v178 = vunpack.c.l.bf16 %v136
    %v179 = vunpack.c.h.bf16 %v136
    %v180 = vunpack.c.l.bf16 %v137
    %v181 = vunpack.c.h.bf16 %v137
    %v182 = vunpack.c.l.bf16 %v138
    %v183 = vunpack.c.h.bf16 %v138
    %v184 = vunpack.c.l.bf16 %v139
    %v185 = vunpack.c.h.bf16 %v139
    %v186 = vunpack.c.l.bf16 %v140
    %v187 = vunpack.c.h.bf16 %v140
    %v188 = vunpack.c.l.bf16 %v141
    %v189 = vunpack.c.h.bf16 %v141
    %v190 = vrot.slane %v142, 4
    %v191 = vadd.f32 %v142, %v190
    %v192 = vrot.slane %v191, 2
    %v193 = vadd.f32 %v191, %v192
    %v194 = vrot.slane %v193, 1
    %v195 = vadd.f32 %v193, %v194
    %v196 = vrot.slane %v143, 4
    %v197 = vadd.f32 %v143, %v196
    %v198 = vrot.slane %v197, 2
    %v199 = vadd.f32 %v197, %v198
    %v200 = vrot.slane %v199, 1
    %v201 = vadd.f32 %v199, %v200
    %v202 = vrot.slane %v144, 4
    %v203 = vadd.f32 %v144, %v202
    %v204 = vrot.slane %v203, 2
    %v205 = vadd.f32 %v203, %v204
    %v206 = vrot.slane %v205, 1
    %v207 = vadd.f32 %v205, %v206
    %v208 = vrot.slane %v145, 4
    %v209 = vadd.f32 %v145, %v208
    %v210 = vrot.slane %v209, 2
    %v211 = vadd.f32 %v209, %v210
    %v212 = vrot.slane %v211, 1
    %v213 = vadd.f32 %v211, %v212
    %v214 = vrot.slane %v146, 4
    %v215 = vadd.f32 %v146, %v214
    %v216 = vrot.slane %v215, 2
    %v217 = vadd.f32 %v215, %v216
    %v218 = vrot.slane %v217, 1
    %v219 = vadd.f32 %v217, %v218
    %v220 = vrot.slane %v147, 4
    %v221 = vadd.f32 %v147, %v220
    %v222 = vrot.slane %v221, 2
    %v223 = vadd.f32 %v221, %v222
    %v224 = vrot.slane %v223, 1
    %v225 = vadd.f32 %v223, %v224
    %v226 = vrot.slane %v148, 4
    %v227 = vadd.f32 %v148, %v226
    %v228 = vrot.slane %v227, 2
    %v229 = vadd.f32 %v227, %v228
    %v230 = vrot.slane %v229, 1
    %v231 = vadd.f32 %v229, %v230
    %v232 = vrot.slane %v149, 4
    %v233 = vadd.f32 %v149, %v232
    %v234 = vrot.slane %v233, 2
    %v235 = vadd.f32 %v233, %v234
    %v236 = vrot.slane %v235, 1
    %v237 = vadd.f32 %v235, %v236
    %v238 = vrot.slane %v150, 4
    %v239 = vadd.f32 %v150, %v238
    %v240 = vrot.slane %v239, 2
    %v241 = vadd.f32 %v239, %v240
    %v242 = vrot.slane %v241, 1
    %v243 = vadd.f32 %v241, %v242
    %v244 = vrot.slane %v151, 4
    %v245 = vadd.f32 %v151, %v244
    %v246 = vrot.slane %v245, 2
    %v247 = vadd.f32 %v245, %v246
    %v248 = vrot.slane %v247, 1
    %v249 = vadd.f32 %v247, %v248
    %v250 = vrot.slane %v152, 4
    %v251 = vadd.f32 %v152, %v250
    %v252 = vrot.slane %v251, 2
    %v253 = vadd.f32 %v251, %v252
    %v254 = vrot.slane %v253, 1
    %v255 = vadd.f32 %v253, %v254
    %v256 = vrot.slane %v153, 4
    %v257 = vadd.f32 %v153, %v256
    %v258 = vrot.slane %v257, 2
    %v259 = vadd.f32 %v257, %v258
    %v260 = vrot.slane %v259, 1
    %v261 = vadd.f32 %v259, %v260
    %v262 = vrot.slane %v154, 4
    %v263 = vadd.f32 %v154, %v262
    %v264 = vrot.slane %v263, 2
    %v265 = vadd.f32 %v263, %v264
    %v266 = vrot.slane %v265, 1
    %v267 = vadd.f32 %v265, %v266
    %v268 = vrot.slane %v155, 4
    %v269 = vadd.f32 %v155, %v268
    %v270 = vrot.slane %v269, 2
    %v271 = vadd.f32 %v269, %v270
    %v272 = vrot.slane %v271, 1
    %v273 = vadd.f32 %v271, %v272
    %v274 = vrot.slane %v156, 4
    %v275 = vadd.f32 %v156, %v274
    %v276 = vrot.slane %v275, 2
    %v277 = vadd.f32 %v275, %v276
    %v278 = vrot.slane %v277, 1
    %v279 = vadd.f32 %v277, %v278
    %v280 = vrot.slane %v157, 4
    %v281 = vadd.f32 %v157, %v280
    %v282 = vrot.slane %v281, 2
    %v283 = vadd.f32 %v281, %v282
    %v284 = vrot.slane %v283, 1
    %v285 = vadd.f32 %v283, %v284
    %v286 = vrot.slane %v158, 4
    %v287 = vadd.f32 %v158, %v286
    %v288 = vrot.slane %v287, 2
    %v289 = vadd.f32 %v287, %v288
    %v290 = vrot.slane %v289, 1
    %v291 = vadd.f32 %v289, %v290
    %v292 = vrot.slane %v159, 4
    %v293 = vadd.f32 %v159, %v292
    %v294 = vrot.slane %v293, 2
    %v295 = vadd.f32 %v293, %v294
    %v296 = vrot.slane %v295, 1
    %v297 = vadd.f32 %v295, %v296
    %v298 = vrot.slane %v160, 4
    %v299 = vadd.f32 %v160, %v298
    %v300 = vrot.slane %v299, 2
    %v301 = vadd.f32 %v299, %v300
    %v302 = vrot.slane %v301, 1
    %v303 = vadd.f32 %v301, %v302
    %v304 = vrot.slane %v161, 4
    %v305 = vadd.f32 %v161, %v304
    %v306 = vrot.slane %v305, 2
    %v307 = vadd.f32 %v305, %v306
    %v308 = vrot.slane %v307, 1
    %v309 = vadd.f32 %v307, %v308
    %v310 = vrot.slane %v162, 4
    %v311 = vadd.f32 %v162, %v310
    %v312 = vrot.slane %v311, 2
    %v313 = vadd.f32 %v311, %v312
    %v314 = vrot.slane %v313, 1
    %v315 = vadd.f32 %v313, %v314
    %v316 = vrot.slane %v163, 4
    %v317 = vadd.f32 %v163, %v316
    %v318 = vrot.slane %v317, 2
    %v319 = vadd.f32 %v317, %v318
    %v320 = vrot.slane %v319, 1
    %v321 = vadd.f32 %v319, %v320
    %v322 = vrot.slane %v164, 4
    %v323 = vadd.f32 %v164, %v322
    %v324 = vrot.slane %v323, 2
    %v325 = vadd.f32 %v323, %v324
    %v326 = vrot.slane %v325, 1
    %v327 = vadd.f32 %v325, %v326
    %v328 = vrot.slane %v165, 4
    %v329 = vadd.f32 %v165, %v328
    %v330 = vrot.slane %v329, 2
    %v331 = vadd.f32 %v329, %v330
    %v332 = vrot.slane %v331, 1
    %v333 = vadd.f32 %v331, %v332
    %v334 = vrot.slane %v166, 4
    %v335 = vadd.f32 %v166, %v334
    %v336 = vrot.slane %v335, 2
    %v337 = vadd.f32 %v335, %v336
    %v338 = vrot.slane %v337, 1
    %v339 = vadd.f32 %v337, %v338
    %v340 = vrot.slane %v167, 4
    %v341 = vadd.f32 %v167, %v340
    %v342 = vrot.slane %v341, 2
    %v343 = vadd.f32 %v341, %v342
    %v344 = vrot.slane %v343, 1
    %v345 = vadd.f32 %v343, %v344
    %v346 = vrot.slane %v168, 4
    %v347 = vadd.f32 %v168, %v346
    %v348 = vrot.slane %v347, 2
    %v349 = vadd.f32 %v347, %v348
    %v350 = vrot.slane %v349, 1
    %v351 = vadd.f32 %v349, %v350
    %v352 = vrot.slane %v169, 4
    %v353 = vadd.f32 %v169, %v352
    %v354 = vrot.slane %v353, 2
    %v355 = vadd.f32 %v353, %v354
    %v356 = vrot.slane %v355, 1
    %v357 = vadd.f32 %v355, %v356
    %v358 = vrot.slane %v170, 4
    %v359 = vadd.f32 %v170, %v358
    %v360 = vrot.slane %v359, 2
    %v361 = vadd.f32 %v359, %v360
    %v362 = vrot.slane %v361, 1
    %v363 = vadd.f32 %v361, %v362
    %v364 = vrot.slane %v171, 4
    %v365 = vadd.f32 %v171, %v364
    %v366 = vrot.slane %v365, 2
    %v367 = vadd.f32 %v365, %v366
    %v368 = vrot.slane %v367, 1
    %v369 = vadd.f32 %v367, %v368
    %v370 = vrot.slane %v172, 4
    %v371 = vadd.f32 %v172, %v370
    %v372 = vrot.slane %v371, 2
    %v373 = vadd.f32 %v371, %v372
    %v374 = vrot.slane %v373, 1
    %v375 = vadd.f32 %v373, %v374
    %v376 = vrot.slane %v173, 4
    %v377 = vadd.f32 %v173, %v376
    %v378 = vrot.slane %v377, 2
    %v379 = vadd.f32 %v377, %v378
    %v380 = vrot.slane %v379, 1
    %v381 = vadd.f32 %v379, %v380
    %v382 = vrot.slane %v174, 4
    %v383 = vadd.f32 %v174, %v382
    %v384 = vrot.slane %v383, 2
    %v385 = vadd.f32 %v383, %v384
    %v386 = vrot.slane %v385, 1
    %v387 = vadd.f32 %v385, %v386
    %v388 = vrot.slane %v175, 4
    %v389 = vadd.f32 %v175, %v388
    %v390 = vrot.slane %v389, 2
    %v391 = vadd.f32 %v389, %v390
    %v392 = vrot.slane %v391, 1
    %v393 = vadd.f32 %v391, %v392
    %v394 = vrot.slane %v176, 4
    %v395 = vadd.f32 %v176, %v394
    %v396 = vrot.slane %v395, 2
    %v397 = vadd.f32 %v395, %v396
    %v398 = vrot.slane %v397, 1
    %v399 = vadd.f32 %v397, %v398
    %v400 = vrot.slane %v177, 4
    %v401 = vadd.f32 %v177, %v400
    %v402 = vrot.slane %v401, 2
    %v403 = vadd.f32 %v401, %v402
    %v404 = vrot.slane %v403, 1
    %v405 = vadd.f32 %v403, %v404
    %v406 = vrot.slane %v178, 4
    %v407 = vadd.f32 %v178, %v406
    %v408 = vrot.slane %v407, 2
    %v409 = vadd.f32 %v407, %v408
    %v410 = vrot.slane %v409, 1
    %v411 = vadd.f32 %v409, %v410
    %v412 = vrot.slane %v179, 4
    %v413 = vadd.f32 %v179, %v412
    %v414 = vrot.slane %v413, 2
    %v415 = vadd.f32 %v413, %v414
    %v416 = vrot.slane %v415, 1
    %v417 = vadd.f32 %v415, %v416
    %v418 = vrot.slane %v180, 4
    %v419 = vadd.f32 %v180, %v418
    %v420 = vrot.slane %v419, 2
    %v421 = vadd.f32 %v419, %v420
    %v422 = vrot.slane %v421, 1
    %v423 = vadd.f32 %v421, %v422
    %v424 = vrot.slane %v181, 4
    %v425 = vadd.f32 %v181, %v424
    %v426 = vrot.slane %v425, 2
    %v427 = vadd.f32 %v425, %v426
    %v428 = vrot.slane %v427, 1
    %v429 = vadd.f32 %v427, %v428
    %v430 = vrot.slane %v182, 4
    %v431 = vadd.f32 %v182, %v430
    %v432 = vrot.slane %v431, 2
    %v433 = vadd.f32 %v431, %v432
    %v434 = vrot.slane %v433, 1
    %v435 = vadd.f32 %v433, %v434
    %v436 = vrot.slane %v183, 4
    %v437 = vadd.f32 %v183, %v436
    %v438 = vrot.slane %v437, 2
    %v439 = vadd.f32 %v437, %v438
    %v440 = vrot.slane %v439, 1
    %v441 = vadd.f32 %v439, %v440
    %v442 = vrot.slane %v184, 4
    %v443 = vadd.f32 %v184, %v442
    %v444 = vrot.slane %v443, 2
    %v445 = vadd.f32 %v443, %v444
    %v446 = vrot.slane %v445, 1
    %v447 = vadd.f32 %v445, %v446
    %v448 = vrot.slane %v185, 4
    %v449 = vadd.f32 %v185, %v448
    %v450 = vrot.slane %v449, 2
    %v451 = vadd.f32 %v449, %v450
    %v452 = vrot.slane %v451, 1
    %v453 = vadd.f32 %v451, %v452
    %v454 = vrot.slane %v186, 4
    %v455 = vadd.f32 %v186, %v454
    %v456 = vrot.slane %v455, 2
    %v457 = vadd.f32 %v455, %v456
    %v458 = vrot.slane %v457, 1
    %v459 = vadd.f32 %v457, %v458
    %v460 = vrot.slane %v187, 4
    %v461 = vadd.f32 %v187, %v460
    %v462 = vrot.slane %v461, 2
    %v463 = vadd.f32 %v461, %v462
    %v464 = vrot.slane %v463, 1
    %v465 = vadd.f32 %v463, %v464
    %v466 = vrot.slane %v188, 4
    %v467 = vadd.f32 %v188, %v466
    %v468 = vrot.slane %v467, 2
    %v469 = vadd.f32 %v467, %v468
    %v470 = vrot.slane %v469, 1
    %v471 = vadd.f32 %v469, %v470
    %v472 = vrot.slane %v189, 4
    %v473 = vadd.f32 %v189, %v472
    %v474 = vrot.slane %v473, 2
    %v475 = vadd.f32 %v473, %v474
    %v476 = vrot.slane %v475, 1
    %v477 = vadd.f32 %v475, %v476
    %vm526 = vcmask 1041409
    %v527 = vsel %vm526, %v231, %v195
    %vm528 = vcmask 1042434
    %v529 = vsel %vm528, %v267, %v527
    %vm530 = vcmask 1043459
    %v531 = vsel %vm530, %v303, %v529
    %vm532 = vcmask 1044484
    %v533 = vsel %vm532, %v339, %v531
    %vm534 = vcmask 1045509
    %v535 = vsel %vm534, %v375, %v533
    %vm536 = vcmask 1046534
    %v537 = vsel %vm536, %v411, %v535
    %vm538 = vcmask 1047559
    %v539 = vsel %vm538, %v447, %v537
    %v540 = vsel %vm526, %v237, %v201
    %v541 = vsel %vm528, %v273, %v540
    %v542 = vsel %vm530, %v309, %v541
    %v543 = vsel %vm532, %v345, %v542
    %v544 = vsel %vm534, %v381, %v543
    %v545 = vsel %vm536, %v417, %v544
    %v546 = vsel %vm538, %v453, %v545
    %v547 = vsel %vm526, %v243, %v207
    %v548 = vsel %vm528, %v279, %v547
    %v549 = vsel %vm530, %v315, %v548
    %v550 = vsel %vm532, %v351, %v549
    %v551 = vsel %vm534, %v387, %v550
    %v552 = vsel %vm536, %v423, %v551
    %v553 = vsel %vm538, %v459, %v552
    %v554 = vsel %vm526, %v249, %v213
    %v555 = vsel %vm528, %v285, %v554
    %v556 = vsel %vm530, %v321, %v555
    %v557 = vsel %vm532, %v357, %v556
    %v558 = vsel %vm534, %v393, %v557
    %v559 = vsel %vm536, %v429, %v558
    %v560 = vsel %vm538, %v465, %v559
    %v561 = vsel %vm526, %v255, %v219
    %v562 = vsel %vm528, %v291, %v561
    %v563 = vsel %vm530, %v327, %v562
    %v564 = vsel %vm532, %v363, %v563
    %v565 = vsel %vm534, %v399, %v564
    %v566 = vsel %vm536, %v435, %v565
    %v567 = vsel %vm538, %v471, %v566
    %v568 = vsel %vm526, %v261, %v225
    %v569 = vsel %vm528, %v297, %v568
    %v570 = vsel %vm530, %v333, %v569
    %v571 = vsel %vm532, %v369, %v570
    %v572 = vsel %vm534, %v405, %v571
    %v573 = vsel %vm536, %v441, %v572
    %v574 = vsel %vm538, %v477, %v573
    %v581 = vadd.f32 %v112, %v539
    %v582 = vadd.f32 %v113, %v546
    %v583 = vadd.f32 %v114, %v553
    %v584 = vadd.f32 %v115, %v560
    %v585 = vadd.f32 %v116, %v567
    %v586 = vadd.f32 %v117, %v574
    %587 = vst [vmem:[#allocation2] sm:$0xff] %v581
    %588 = vst [vmem:[#allocation2 + $0x8] sm:$0xff] %v582
    %589 = vst [vmem:[#allocation2 + $0x10] sm:$0xff] %v583
    %590 = vst [vmem:[#allocation2 + $0x18] sm:$0xff] %v584
    %591 = vst [vmem:[#allocation2 + $0x20] sm:$0xff] %v585
    %592 = vst [vmem:[#allocation2 + $0x28] sm:$0xff] %v586
    // Predicated region
    $region62: #{tpu_custom_call.1} parent=1 // pred_check
      %p593 = pneg %p102
    $region63: #{tpu_custom_call.1} parent=1 // pred_check_branch
      %595 = sbr.rel (%p593) target = $region65
    $region64: #{tpu_custom_call.1} parent=1 // pred_region
      %v596 = vld [vmem:[#allocation2] sm:$0xff]
      %v597 = vld [vmem:[#allocation2 + $0x8] sm:$0xff]
      %v598 = vld [vmem:[#allocation2 + $0x10] sm:$0xff]
      %v599 = vld [vmem:[#allocation2 + $0x18] sm:$0xff]
      %v600 = vld [vmem:[#allocation2 + $0x20] sm:$0xff]
      %v601 = vld [vmem:[#allocation2 + $0x28] sm:$0xff]
      %v602 = vmul.f32 %v596, 0.125
      %v603 = vmul.f32 %v597, 0.125
      %v604 = vmul.f32 %v598, 0.125
      %v605 = vmul.f32 %v599, 0.125
      %v606 = vmul.f32 %v600, 0.125
      %v607 = vmul.f32 %v601, 0.125
      %v608 = vpack.c.bf16 %v602, %v602
      %v609 = vpack.c.bf16 %v603, %v603
      %v610 = vpack.c.bf16 %v604, %v604
      %v611 = vpack.c.bf16 %v605, %v605
      %v612 = vpack.c.bf16 %v606, %v606
      %v613 = vpack.c.bf16 %v607, %v607
      %v614 = vld [vmem:[#allocation9] sm:$0xff]
      %v615 = vld [vmem:[#allocation9 + $0x8] sm:$0xff]
      %v616 = vld [vmem:[#allocation9 + $0x10] sm:$0xff]
      %v617 = vld [vmem:[#allocation9 + $0x18] sm:$0xff]
      %v618 = vld [vmem:[#allocation9 + $0x20] sm:$0xff]
      %v619 = vld [vmem:[#allocation9 + $0x28] sm:$0xff]
      %v620 = vld [vmem:[#allocation9 + $0x30] sm:$0xff]
      %v621 = vld [vmem:[#allocation9 + $0x38] sm:$0xff]
      %v622 = vld [vmem:[#allocation9 + $0x40] sm:$0xff]
      %v623 = vld [vmem:[#allocation9 + $0x48] sm:$0xff]
      %v624 = vld [vmem:[#allocation9 + $0x50] sm:$0xff]
      %v625 = vld [vmem:[#allocation9 + $0x58] sm:$0xff]
      %v626 = vld [vmem:[#allocation9 + $0x60] sm:$0xff]
      %v627 = vld [vmem:[#allocation9 + $0x68] sm:$0xff]
      %v628 = vld [vmem:[#allocation9 + $0x70] sm:$0xff]
      %v629 = vld [vmem:[#allocation9 + $0x78] sm:$0xff]
      %v630 = vld [vmem:[#allocation9 + $0x80] sm:$0xff]
      %v631 = vld [vmem:[#allocation9 + $0x88] sm:$0xff]
      %v632 = vld [vmem:[#allocation9 + $0x90] sm:$0xff]
      %v633 = vld [vmem:[#allocation9 + $0x98] sm:$0xff]
      %v634 = vld [vmem:[#allocation9 + $0xa0] sm:$0xff]
      %v635 = vld [vmem:[#allocation9 + $0xa8] sm:$0xff]
      %v636 = vld [vmem:[#allocation9 + $0xb0] sm:$0xff]
      %v637 = vld [vmem:[#allocation9 + $0xb8] sm:$0xff]
      %v638 = vld [vmem:[#allocation9 + $0xc0] sm:$0xff]
      %v639 = vld [vmem:[#allocation9 + $0xc8] sm:$0xff]
      %v640 = vld [vmem:[#allocation9 + $0xd0] sm:$0xff]
      %v641 = vld [vmem:[#allocation9 + $0xd8] sm:$0xff]
      %v642 = vld [vmem:[#allocation9 + $0xe0] sm:$0xff]
      %v643 = vld [vmem:[#allocation9 + $0xe8] sm:$0xff]
      %v644 = vld [vmem:[#allocation9 + $0xf0] sm:$0xff]
      %v645 = vld [vmem:[#allocation9 + $0xf8] sm:$0xff]
      %v646 = vld [vmem:[#allocation9 + $0x100] sm:$0xff]
      %v647 = vld [vmem:[#allocation9 + $0x108] sm:$0xff]
      %v648 = vld [vmem:[#allocation9 + $0x110] sm:$0xff]
      %v649 = vld [vmem:[#allocation9 + $0x118] sm:$0xff]
      %v650 = vld [vmem:[#allocation9 + $0x120] sm:$0xff]
      %v651 = vld [vmem:[#allocation9 + $0x128] sm:$0xff]
      %v652 = vld [vmem:[#allocation9 + $0x130] sm:$0xff]
      %v653 = vld [vmem:[#allocation9 + $0x138] sm:$0xff]
      %v654 = vld [vmem:[#allocation9 + $0x140] sm:$0xff]
      %v655 = vld [vmem:[#allocation9 + $0x148] sm:$0xff]
      %v656 = vld [vmem:[#allocation9 + $0x150] sm:$0xff]
      %v657 = vld [vmem:[#allocation9 + $0x158] sm:$0xff]
      %v658 = vld [vmem:[#allocation9 + $0x160] sm:$0xff]
      %v659 = vld [vmem:[#allocation9 + $0x168] sm:$0xff]
      %v660 = vld [vmem:[#allocation9 + $0x170] sm:$0xff]
      %v661 = vld [vmem:[#allocation9 + $0x178] sm:$0xff]
      %v662 = vld [vmem:[#allocation9 + $0x180] sm:$0xff]
      %v663 = vld [vmem:[#allocation9 + $0x188] sm:$0xff]
      %v664 = vld [vmem:[#allocation9 + $0x190] sm:$0xff]
      %v665 = vld [vmem:[#allocation9 + $0x198] sm:$0xff]
      %v666 = vld [vmem:[#allocation9 + $0x1a0] sm:$0xff]
      %v667 = vld [vmem:[#allocation9 + $0x1a8] sm:$0xff]
      %v668 = vld [vmem:[#allocation9 + $0x1b0] sm:$0xff]
      %v669 = vld [vmem:[#allocation9 + $0x1b8] sm:$0xff]
      %v670 = vld [vmem:[#allocation9 + $0x1c0] sm:$0xff]
      %v671 = vld [vmem:[#allocation9 + $0x1c8] sm:$0xff]
      %v672 = vld [vmem:[#allocation9 + $0x1d0] sm:$0xff]
      %v673 = vld [vmem:[#allocation9 + $0x1d8] sm:$0xff]
      %v674 = vld [vmem:[#allocation9 + $0x1e0] sm:$0xff]
      %v675 = vld [vmem:[#allocation9 + $0x1e8] sm:$0xff]
      %v676 = vld [vmem:[#allocation9 + $0x1f0] sm:$0xff]
      %v677 = vld [vmem:[#allocation9 + $0x1f8] sm:$0xff]
      %v678 = vld [vmem:[#allocation9 + $0x200] sm:$0xff]
      %v679 = vld [vmem:[#allocation9 + $0x208] sm:$0xff]
      %v680 = vld [vmem:[#allocation9 + $0x210] sm:$0xff]
      %v681 = vld [vmem:[#allocation9 + $0x218] sm:$0xff]
      %v682 = vld [vmem:[#allocation9 + $0x220] sm:$0xff]
      %v683 = vld [vmem:[#allocation9 + $0x228] sm:$0xff]
      %v684 = vld [vmem:[#allocation9 + $0x230] sm:$0xff]
      %v685 = vld [vmem:[#allocation9 + $0x238] sm:$0xff]
      %v686 = vld [vmem:[#allocation9 + $0x240] sm:$0xff]
      %v687 = vld [vmem:[#allocation9 + $0x248] sm:$0xff]
      %v688 = vld [vmem:[#allocation9 + $0x250] sm:$0xff]
      %v689 = vld [vmem:[#allocation9 + $0x258] sm:$0xff]
      %v690 = vld [vmem:[#allocation9 + $0x260] sm:$0xff]
      %v691 = vld [vmem:[#allocation9 + $0x268] sm:$0xff]
      %v692 = vld [vmem:[#allocation9 + $0x270] sm:$0xff]
      %v693 = vld [vmem:[#allocation9 + $0x278] sm:$0xff]
      %v694 = vld [vmem:[#allocation9 + $0x280] sm:$0xff]
      %v695 = vld [vmem:[#allocation9 + $0x288] sm:$0xff]
      %v696 = vld [vmem:[#allocation9 + $0x290] sm:$0xff]
      %v697 = vld [vmem:[#allocation9 + $0x298] sm:$0xff]
      %v698 = vld [vmem:[#allocation9 + $0x2a0] sm:$0xff]
      %v699 = vld [vmem:[#allocation9 + $0x2a8] sm:$0xff]
      %v700 = vld [vmem:[#allocation9 + $0x2b0] sm:$0xff]
      %v701 = vld [vmem:[#allocation9 + $0x2b8] sm:$0xff]
      %v702 = vld [vmem:[#allocation9 + $0x2c0] sm:$0xff]
      %v703 = vld [vmem:[#allocation9 + $0x2c8] sm:$0xff]
      %v704 = vld [vmem:[#allocation9 + $0x2d0] sm:$0xff]
      %v705 = vld [vmem:[#allocation9 + $0x2d8] sm:$0xff]
      %v706 = vld [vmem:[#allocation9 + $0x2e0] sm:$0xff]
      %v707 = vld [vmem:[#allocation9 + $0x2e8] sm:$0xff]
      %v708 = vld [vmem:[#allocation9 + $0x2f0] sm:$0xff]
      %v709 = vld [vmem:[#allocation9 + $0x2f8] sm:$0xff]
      %v710 = vld [vmem:[#allocation9 + $0x300] sm:$0xff]
      %v711 = vld [vmem:[#allocation9 + $0x308] sm:$0xff]
      %v712 = vld [vmem:[#allocation9 + $0x310] sm:$0xff]
      %v713 = vld [vmem:[#allocation9 + $0x318] sm:$0xff]
      %v714 = vld [vmem:[#allocation9 + $0x320] sm:$0xff]
      %v715 = vld [vmem:[#allocation9 + $0x328] sm:$0xff]
      %v716 = vld [vmem:[#allocation9 + $0x330] sm:$0xff]
      %v717 = vld [vmem:[#allocation9 + $0x338] sm:$0xff]
      %v718 = vld [vmem:[#allocation9 + $0x340] sm:$0xff]
      %v719 = vld [vmem:[#allocation9 + $0x348] sm:$0xff]
      %v720 = vld [vmem:[#allocation9 + $0x350] sm:$0xff]
      %v721 = vld [vmem:[#allocation9 + $0x358] sm:$0xff]
      %v722 = vld [vmem:[#allocation9 + $0x360] sm:$0xff]
      %v723 = vld [vmem:[#allocation9 + $0x368] sm:$0xff]
      %v724 = vld [vmem:[#allocation9 + $0x370] sm:$0xff]
      %v725 = vld [vmem:[#allocation9 + $0x378] sm:$0xff]
      %v726 = vld [vmem:[#allocation9 + $0x380] sm:$0xff]
      %v727 = vld [vmem:[#allocation9 + $0x388] sm:$0xff]
      %v728 = vld [vmem:[#allocation9 + $0x390] sm:$0xff]
      %v729 = vld [vmem:[#allocation9 + $0x398] sm:$0xff]
      %v730 = vld [vmem:[#allocation9 + $0x3a0] sm:$0xff]
      %v731 = vld [vmem:[#allocation9 + $0x3a8] sm:$0xff]
      %v732 = vld [vmem:[#allocation9 + $0x3b0] sm:$0xff]
      %v733 = vld [vmem:[#allocation9 + $0x3b8] sm:$0xff]
      %v734 = vld [vmem:[#allocation9 + $0x3c0] sm:$0xff]
      %v735 = vld [vmem:[#allocation9 + $0x3c8] sm:$0xff]
      %v736 = vld [vmem:[#allocation9 + $0x3d0] sm:$0xff]
      %v737 = vld [vmem:[#allocation9 + $0x3d8] sm:$0xff]
      %v738 = vld [vmem:[#allocation9 + $0x3e0] sm:$0xff]
      %v739 = vld [vmem:[#allocation9 + $0x3e8] sm:$0xff]
      %v740 = vld [vmem:[#allocation9 + $0x3f0] sm:$0xff]
      %v741 = vld [vmem:[#allocation9 + $0x3f8] sm:$0xff]
      %v742 = vld [vmem:[#allocation9 + $0x400] sm:$0xff]
      %v743 = vld [vmem:[#allocation9 + $0x408] sm:$0xff]
      %v744 = vld [vmem:[#allocation9 + $0x410] sm:$0xff]
      %v745 = vld [vmem:[#allocation9 + $0x418] sm:$0xff]
      %v746 = vld [vmem:[#allocation9 + $0x420] sm:$0xff]
      %v747 = vld [vmem:[#allocation9 + $0x428] sm:$0xff]
      %v748 = vld [vmem:[#allocation9 + $0x430] sm:$0xff]
      %v749 = vld [vmem:[#allocation9 + $0x438] sm:$0xff]
      %v750 = vld [vmem:[#allocation9 + $0x440] sm:$0xff]
      %v751 = vld [vmem:[#allocation9 + $0x448] sm:$0xff]
      %v752 = vld [vmem:[#allocation9 + $0x450] sm:$0xff]
      %v753 = vld [vmem:[#allocation9 + $0x458] sm:$0xff]
      %v754 = vld [vmem:[#allocation9 + $0x460] sm:$0xff]
      %v755 = vld [vmem:[#allocation9 + $0x468] sm:$0xff]
      %v756 = vld [vmem:[#allocation9 + $0x470] sm:$0xff]
      %v757 = vld [vmem:[#allocation9 + $0x478] sm:$0xff]
      %v758 = vld [vmem:[#allocation9 + $0x480] sm:$0xff]
      %v759 = vld [vmem:[#allocation9 + $0x488] sm:$0xff]
      %v760 = vld [vmem:[#allocation9 + $0x490] sm:$0xff]
      %v761 = vld [vmem:[#allocation9 + $0x498] sm:$0xff]
      %v762 = vld [vmem:[#allocation9 + $0x4a0] sm:$0xff]
      %v763 = vld [vmem:[#allocation9 + $0x4a8] sm:$0xff]
      %v764 = vld [vmem:[#allocation9 + $0x4b0] sm:$0xff]
      %v765 = vld [vmem:[#allocation9 + $0x4b8] sm:$0xff]
      %v766 = vld [vmem:[#allocation9 + $0x4c0] sm:$0xff]
      %v767 = vld [vmem:[#allocation9 + $0x4c8] sm:$0xff]
      %v768 = vld [vmem:[#allocation9 + $0x4d0] sm:$0xff]
      %v769 = vld [vmem:[#allocation9 + $0x4d8] sm:$0xff]
      %v770 = vld [vmem:[#allocation9 + $0x4e0] sm:$0xff]
      %v771 = vld [vmem:[#allocation9 + $0x4e8] sm:$0xff]
      %v772 = vld [vmem:[#allocation9 + $0x4f0] sm:$0xff]
      %v773 = vld [vmem:[#allocation9 + $0x4f8] sm:$0xff]
      %v774 = vld [vmem:[#allocation9 + $0x500] sm:$0xff]
      %v775 = vld [vmem:[#allocation9 + $0x508] sm:$0xff]
      %v776 = vld [vmem:[#allocation9 + $0x510] sm:$0xff]
      %v777 = vld [vmem:[#allocation9 + $0x518] sm:$0xff]
      %v778 = vld [vmem:[#allocation9 + $0x520] sm:$0xff]
      %v779 = vld [vmem:[#allocation9 + $0x528] sm:$0xff]
      %v780 = vld [vmem:[#allocation9 + $0x530] sm:$0xff]
      %v781 = vld [vmem:[#allocation9 + $0x538] sm:$0xff]
      %v782 = vld [vmem:[#allocation9 + $0x540] sm:$0xff]
      %v783 = vld [vmem:[#allocation9 + $0x548] sm:$0xff]
      %v784 = vld [vmem:[#allocation9 + $0x550] sm:$0xff]
      %v785 = vld [vmem:[#allocation9 + $0x558] sm:$0xff]
      %v786 = vld [vmem:[#allocation9 + $0x560] sm:$0xff]
      %v787 = vld [vmem:[#allocation9 + $0x568] sm:$0xff]
      %v788 = vld [vmem:[#allocation9 + $0x570] sm:$0xff]
      %v789 = vld [vmem:[#allocation9 + $0x578] sm:$0xff]
      %v790 = vld [vmem:[#allocation9 + $0x580] sm:$0xff]
      %v791 = vld [vmem:[#allocation9 + $0x588] sm:$0xff]
      %v792 = vld [vmem:[#allocation9 + $0x590] sm:$0xff]
      %v793 = vld [vmem:[#allocation9 + $0x598] sm:$0xff]
      %v794 = vld [vmem:[#allocation9 + $0x5a0] sm:$0xff]
      %v795 = vld [vmem:[#allocation9 + $0x5a8] sm:$0xff]
      %v796 = vld [vmem:[#allocation9 + $0x5b0] sm:$0xff]
      %v797 = vld [vmem:[#allocation9 + $0x5b8] sm:$0xff]
      %v798 = vld [vmem:[#allocation9 + $0x5c0] sm:$0xff]
      %v799 = vld [vmem:[#allocation9 + $0x5c8] sm:$0xff]
      %v800 = vld [vmem:[#allocation9 + $0x5d0] sm:$0xff]
      %v801 = vld [vmem:[#allocation9 + $0x5d8] sm:$0xff]
      %v802 = vld [vmem:[#allocation9 + $0x5e0] sm:$0xff]
      %v803 = vld [vmem:[#allocation9 + $0x5e8] sm:$0xff]
      %v804 = vld [vmem:[#allocation9 + $0x5f0] sm:$0xff]
      %v805 = vld [vmem:[#allocation9 + $0x5f8] sm:$0xff]
      %v806 = vld [vmem:[#allocation7] sm:$0xf]
      %v807 = vld [vmem:[#allocation10] sm:$0xff]
      %v808 = vld [vmem:[#allocation10 + $0x8] sm:$0xff]
      %v809 = vld [vmem:[#allocation10 + $0x10] sm:$0xff]
      %v810 = vld [vmem:[#allocation10 + $0x18] sm:$0xff]
      %v811 = vld [vmem:[#allocation10 + $0x20] sm:$0xff]
      %v812 = vld [vmem:[#allocation10 + $0x28] sm:$0xff]
      %v813 = vld [vmem:[#allocation10 + $0x30] sm:$0xff]
      %v814 = vld [vmem:[#allocation10 + $0x38] sm:$0xff]
      %v815 = vld [vmem:[#allocation10 + $0x40] sm:$0xff]
      %v816 = vld [vmem:[#allocation10 + $0x48] sm:$0xff]
      %v817 = vld [vmem:[#allocation10 + $0x50] sm:$0xff]
      %v818 = vld [vmem:[#allocation10 + $0x58] sm:$0xff]
      %v819 = vld [vmem:[#allocation10 + $0x60] sm:$0xff]
      %v820 = vld [vmem:[#allocation10 + $0x68] sm:$0xff]
      %v821 = vld [vmem:[#allocation10 + $0x70] sm:$0xff]
      %v822 = vld [vmem:[#allocation10 + $0x78] sm:$0xff]
      %v823 = vld [vmem:[#allocation10 + $0x80] sm:$0xff]
      %v824 = vld [vmem:[#allocation10 + $0x88] sm:$0xff]
      %v825 = vld [vmem:[#allocation10 + $0x90] sm:$0xff]
      %v826 = vld [vmem:[#allocation10 + $0x98] sm:$0xff]
      %v827 = vld [vmem:[#allocation10 + $0xa0] sm:$0xff]
      %v828 = vld [vmem:[#allocation10 + $0xa8] sm:$0xff]
      %v829 = vld [vmem:[#allocation10 + $0xb0] sm:$0xff]
      %v830 = vld [vmem:[#allocation10 + $0xb8] sm:$0xff]
      %v831 = vld [vmem:[#allocation10 + $0xc0] sm:$0xff]
      %v832 = vld [vmem:[#allocation10 + $0xc8] sm:$0xff]
      %v833 = vld [vmem:[#allocation10 + $0xd0] sm:$0xff]
      %v834 = vld [vmem:[#allocation10 + $0xd8] sm:$0xff]
      %v835 = vld [vmem:[#allocation10 + $0xe0] sm:$0xff]
      %v836 = vld [vmem:[#allocation10 + $0xe8] sm:$0xff]
      %v837 = vld [vmem:[#allocation10 + $0xf0] sm:$0xff]
      %v838 = vld [vmem:[#allocation10 + $0xf8] sm:$0xff]
      %v871 = vunpack.c.l.b16 %v807
      %v872 = vunpack.c.h.b16 %v807
      %v873 = vunpack.c.l.b16 %v808
      %v874 = vunpack.c.h.b16 %v808
      %v875 = vunpack.c.l.b16 %v809
      %v876 = vunpack.c.h.b16 %v809
      %v877 = vunpack.c.l.b16 %v810
      %v878 = vunpack.c.h.b16 %v810
      %v879 = vunpack.c.l.b16 %v811
      %v880 = vunpack.c.h.b16 %v811
      %v881 = vunpack.c.l.b16 %v812
      %v882 = vunpack.c.h.b16 %v812
      %v883 = vunpack.c.l.b16 %v813
      %v884 = vunpack.c.h.b16 %v813
      %v885 = vunpack.c.l.b16 %v814
      %v886 = vunpack.c.h.b16 %v814
      %v887 = vunpack.c.l.b16 %v815
      %v888 = vunpack.c.h.b16 %v815
      %v889 = vunpack.c.l.b16 %v816
      %v890 = vunpack.c.h.b16 %v816
      %v891 = vunpack.c.l.b16 %v817
      %v892 = vunpack.c.h.b16 %v817
      %v893 = vunpack.c.l.b16 %v818
      %v894 = vunpack.c.h.b16 %v818
      %v895 = vunpack.c.l.b16 %v819
      %v896 = vunpack.c.h.b16 %v819
      %v897 = vunpack.c.l.b16 %v820
      %v898 = vunpack.c.h.b16 %v820
      %v899 = vunpack.c.l.b16 %v821
      %v900 = vunpack.c.h.b16 %v821
      %v901 = vunpack.c.l.b16 %v822
      %v902 = vunpack.c.h.b16 %v822
      %v903 = vunpack.c.l.b16 %v823
      %v904 = vunpack.c.h.b16 %v823
      %v905 = vunpack.c.l.b16 %v824
      %v906 = vunpack.c.h.b16 %v824
      %v907 = vunpack.c.l.b16 %v825
      %v908 = vunpack.c.h.b16 %v825
      %v909 = vunpack.c.l.b16 %v826
      %v910 = vunpack.c.h.b16 %v826
      %v911 = vunpack.c.l.b16 %v827
      %v912 = vunpack.c.h.b16 %v827
      %v913 = vunpack.c.l.b16 %v828
      %v914 = vunpack.c.h.b16 %v828
      %v915 = vunpack.c.l.b16 %v829
      %v916 = vunpack.c.h.b16 %v829
      %v917 = vunpack.c.l.b16 %v830
      %v918 = vunpack.c.h.b16 %v830
      %v919 = vunpack.c.l.b16 %v831
      %v920 = vunpack.c.h.b16 %v831
      %v921 = vunpack.c.l.b16 %v832
      %v922 = vunpack.c.h.b16 %v832
      %v923 = vunpack.c.l.b16 %v833
      %v924 = vunpack.c.h.b16 %v833
      %v925 = vunpack.c.l.b16 %v834
      %v926 = vunpack.c.h.b16 %v834
      %v927 = vunpack.c.l.b16 %v835
      %v928 = vunpack.c.h.b16 %v835
      %v929 = vunpack.c.l.b16 %v836
      %v930 = vunpack.c.h.b16 %v836
      %v931 = vunpack.c.l.b16 %v837
      %v932 = vunpack.c.h.b16 %v837
      %v933 = vunpack.c.l.b16 %v838
      %v934 = vunpack.c.h.b16 %v838
      %v935 = vpack.c.b16 %v875, %v871
      %v936 = vpack.c.b16 %v876, %v872
      %v937 = vpack.c.b16 %v877, %v873
      %v938 = vpack.c.b16 %v878, %v874
      %v939 = vpack.c.b16 %v883, %v879
      %v940 = vpack.c.b16 %v884, %v880
      %v941 = vpack.c.b16 %v885, %v881
      %v942 = vpack.c.b16 %v886, %v882
      %v943 = vpack.c.b16 %v891, %v887
      %v944 = vpack.c.b16 %v892, %v888
      %v945 = vpack.c.b16 %v893, %v889
      %v946 = vpack.c.b16 %v894, %v890
      %v947 = vpack.c.b16 %v899, %v895
      %v948 = vpack.c.b16 %v900, %v896
      %v949 = vpack.c.b16 %v901, %v897
      %v950 = vpack.c.b16 %v902, %v898
      %v951 = vpack.c.b16 %v907, %v903
      %v952 = vpack.c.b16 %v908, %v904
      %v953 = vpack.c.b16 %v909, %v905
      %v954 = vpack.c.b16 %v910, %v906
      %v955 = vpack.c.b16 %v915, %v911
      %v956 = vpack.c.b16 %v916, %v912
      %v957 = vpack.c.b16 %v917, %v913
      %v958 = vpack.c.b16 %v918, %v914
      %v959 = vpack.c.b16 %v923, %v919
      %v960 = vpack.c.b16 %v924, %v920
      %v961 = vpack.c.b16 %v925, %v921
      %v962 = vpack.c.b16 %v926, %v922
      %v963 = vpack.c.b16 %v931, %v927
      %v964 = vpack.c.b16 %v932, %v928
      %v965 = vpack.c.b16 %v933, %v929
      %v966 = vpack.c.b16 %v934, %v930
      %999 = vmatprep.subr.bf16.mxu0 %v964
      %1000 = vmatpush1.bf16.msra.mxu0 %v963
      %1001 = vmatprep.subr.bf16.mxu0 %v960
      %1002 = vmatpush1.bf16.msra.mxu0 %v959
      %1003 = vmatprep.subr.bf16.mxu0 %v956
      %1004 = vmatpush1.bf16.msra.mxu0 %v955
      %1005 = vmatprep.subr.bf16.mxu0 %v952
      %1006 = vmatpush1.bf16.msra.mxu0 %v951
      %1007 = vmatprep.subr.bf16.mxu0 %v948
      %1008 = vmatpush1.bf16.msra.mxu0 %v947
      %1009 = vmatprep.subr.bf16.mxu0 %v944
      %1010 = vmatpush1.bf16.msra.mxu0 %v943
      %1011 = vmatprep.subr.bf16.mxu0 %v940
      %1012 = vmatpush1.bf16.msra.mxu0 %v939
      %1013 = vmatprep.subr.bf16.mxu0 %v936
      %1014 = vmatpush1.bf16.msra.mxu0 %v935
      %1015 = vmatprep.subr.bf16.mxu0 0
      %1016 = vmatpush2.bf16.msra.mxu0 0
      %1017 = vmatprep.subr.bf16.mxu0 0
      %1018 = vmatpush2.bf16.msra.mxu0 0
      %1019 = vmatprep.subr.bf16.mxu0 0
      %1020 = vmatpush2.bf16.msra.mxu0 0
      %1021 = vmatprep.subr.bf16.mxu0 0
      %1022 = vmatpush2.bf16.msra.mxu0 0
      %1023 = vmatprep.subr.bf16.mxu0 0
      %1024 = vmatpush2.bf16.msra.mxu0 0
      %1025 = vmatprep.subr.bf16.mxu0 0
      %1026 = vmatpush2.bf16.msra.mxu0 0
      %1027 = vmatprep.subr.bf16.mxu0 0
      %1028 = vmatpush2.bf16.msra.mxu0 0
      %1029 = vmatprep.subr.bf16.mxu0 0
      %1030 = vmatpush2.bf16.msra.mxu0 0
      %1031 = vmatprep.mubr.bf16.mxu0 0
      %1032 = vmatmul.mubr.bf16.gmra.mxu0 %v806
      %v1033 = vpop.f32.mrf.mxu0
      %v1034 = vadd.f32 0.0, %v1033
      %v1035 = vpop.f32.mrf.mxu0
      %v1036 = vadd.f32 0.0, %v1035
      %v1037 = vpop.f32.mrf.mxu0
      %v1038 = vpop.f32.mrf.mxu0
      %1039 = vdwg.mxu0
      %1040 = vmatprep.subr.bf16.mxu0 %v966
      %1041 = vmatpush1.bf16.msra.mxu0 %v965
      %1042 = vmatprep.subr.bf16.mxu0 %v962
      %1043 = vmatpush1.bf16.msra.mxu0 %v961
      %1044 = vmatprep.subr.bf16.mxu0 %v958
      %1045 = vmatpush1.bf16.msra.mxu0 %v957
      %1046 = vmatprep.subr.bf16.mxu0 %v954
      %1047 = vmatpush1.bf16.msra.mxu0 %v953
      %1048 = vmatprep.subr.bf16.mxu0 %v950
      %1049 = vmatpush1.bf16.msra.mxu0 %v949
      %1050 = vmatprep.subr.bf16.mxu0 %v946
      %1051 = vmatpush1.bf16.msra.mxu0 %v945
      %1052 = vmatprep.subr.bf16.mxu0 %v942
      %1053 = vmatpush1.bf16.msra.mxu0 %v941
      %1054 = vmatprep.subr.bf16.mxu0 %v938
      %1055 = vmatpush1.bf16.msra.mxu0 %v937
      %1056 = vmatprep.subr.bf16.mxu0 0
      %1057 = vmatpush2.bf16.msra.mxu0 0
      %1058 = vmatprep.subr.bf16.mxu0 0
      %1059 = vmatpush2.bf16.msra.mxu0 0
      %1060 = vmatprep.subr.bf16.mxu0 0
      %1061 = vmatpush2.bf16.msra.mxu0 0
      %1062 = vmatprep.subr.bf16.mxu0 0
      %1063 = vmatpush2.bf16.msra.mxu0 0
      %1064 = vmatprep.subr.bf16.mxu0 0
      %1065 = vmatpush2.bf16.msra.mxu0 0
      %1066 = vmatprep.subr.bf16.mxu0 0
      %1067 = vmatpush2.bf16.msra.mxu0 0
      %1068 = vmatprep.subr.bf16.mxu0 0
      %1069 = vmatpush2.bf16.msra.mxu0 0
      %1070 = vmatprep.subr.bf16.mxu0 0
      %1071 = vmatpush2.bf16.msra.mxu0 0
      %1072 = vmatprep.mubr.bf16.mxu0 0
      %1073 = vmatmul.mubr.bf16.gmra.mxu0 %v806
      %v1074 = vpop.f32.mrf.mxu0
      %v1075 = vadd.f32 0.0, %v1074
      %v1076 = vpop.f32.mrf.mxu0
      %v1077 = vadd.f32 0.0, %v1076
      %v1078 = vpop.f32.mrf.mxu0
      %v1079 = vpop.f32.mrf.mxu0
      %1080 = vdwg.mxu0
      %v1273 = vunpack.c.l.b16 %v614
      %v1274 = vunpack.c.h.b16 %v614
      %v1275 = vunpack.c.l.b16 %v615
      %v1276 = vunpack.c.h.b16 %v615
      %v1277 = vunpack.c.l.b16 %v616
      %v1278 = vunpack.c.h.b16 %v616
      %v1279 = vunpack.c.l.b16 %v617
      %v1280 = vunpack.c.h.b16 %v617
      %v1281 = vunpack.c.l.b16 %v618
      %v1282 = vunpack.c.h.b16 %v618
      %v1283 = vunpack.c.l.b16 %v619
      %v1284 = vunpack.c.h.b16 %v619
      %v1285 = vunpack.c.l.b16 %v620
      %v1286 = vunpack.c.h.b16 %v620
      %v1287 = vunpack.c.l.b16 %v621
      %v1288 = vunpack.c.h.b16 %v621
      %v1289 = vunpack.c.l.b16 %v622
      %v1290 = vunpack.c.h.b16 %v622
      %v1291 = vunpack.c.l.b16 %v623
      %v1292 = vunpack.c.h.b16 %v623
      %v1293 = vunpack.c.l.b16 %v624
      %v1294 = vunpack.c.h.b16 %v624
      %v1295 = vunpack.c.l.b16 %v625
      %v1296 = vunpack.c.h.b16 %v625
      %v1297 = vunpack.c.l.b16 %v626
      %v1298 = vunpack.c.h.b16 %v626
      %v1299 = vunpack.c.l.b16 %v627
      %v1300 = vunpack.c.h.b16 %v627
      %v1301 = vunpack.c.l.b16 %v628
      %v1302 = vunpack.c.h.b16 %v628
      %v1303 = vunpack.c.l.b16 %v629
      %v1304 = vunpack.c.h.b16 %v629
      %v1305 = vunpack.c.l.b16 %v630
      %v1306 = vunpack.c.h.b16 %v630
      %v1307 = vunpack.c.l.b16 %v631
      %v1308 = vunpack.c.h.b16 %v631
      %v1309 = vunpack.c.l.b16 %v632
      %v1310 = vunpack.c.h.b16 %v632
      %v1311 = vunpack.c.l.b16 %v633
      %v1312 = vunpack.c.h.b16 %v633
      %v1313 = vunpack.c.l.b16 %v634
      %v1314 = vunpack.c.h.b16 %v634
      %v1315 = vunpack.c.l.b16 %v635
      %v1316 = vunpack.c.h.b16 %v635
      %v1317 = vunpack.c.l.b16 %v636
      %v1318 = vunpack.c.h.b16 %v636
      %v1319 = vunpack.c.l.b16 %v637
      %v1320 = vunpack.c.h.b16 %v637
      %v1321 = vunpack.c.l.b16 %v638
      %v1322 = vunpack.c.h.b16 %v638
      %v1323 = vunpack.c.l.b16 %v639
      %v1324 = vunpack.c.h.b16 %v639
      %v1325 = vunpack.c.l.b16 %v640
      %v1326 = vunpack.c.h.b16 %v640
      %v1327 = vunpack.c.l.b16 %v641
      %v1328 = vunpack.c.h.b16 %v641
      %v1329 = vunpack.c.l.b16 %v642
      %v1330 = vunpack.c.h.b16 %v642
      %v1331 = vunpack.c.l.b16 %v643
      %v1332 = vunpack.c.h.b16 %v643
      %v1333 = vunpack.c.l.b16 %v644
      %v1334 = vunpack.c.h.b16 %v644
      %v1335 = vunpack.c.l.b16 %v645
      %v1336 = vunpack.c.h.b16 %v645
      %v1337 = vunpack.c.l.b16 %v646
      %v1338 = vunpack.c.h.b16 %v646
      %v1339 = vunpack.c.l.b16 %v647
      %v1340 = vunpack.c.h.b16 %v647
      %v1341 = vunpack.c.l.b16 %v648
      %v1342 = vunpack.c.h.b16 %v648
      %v1343 = vunpack.c.l.b16 %v649
      %v1344 = vunpack.c.h.b16 %v649
      %v1345 = vunpack.c.l.b16 %v650
      %v1346 = vunpack.c.h.b16 %v650
      %v1347 = vunpack.c.l.b16 %v651
      %v1348 = vunpack.c.h.b16 %v651
      %v1349 = vunpack.c.l.b16 %v652
      %v1350 = vunpack.c.h.b16 %v652
      %v1351 = vunpack.c.l.b16 %v653
      %v1352 = vunpack.c.h.b16 %v653
      %v1353 = vunpack.c.l.b16 %v654
      %v1354 = vunpack.c.h.b16 %v654
      %v1355 = vunpack.c.l.b16 %v655
      %v1356 = vunpack.c.h.b16 %v655
      %v1357 = vunpack.c.l.b16 %v656
      %v1358 = vunpack.c.h.b16 %v656
      %v1359 = vunpack.c.l.b16 %v657
      %v1360 = vunpack.c.h.b16 %v657
      %v1361 = vunpack.c.l.b16 %v658
      %v1362 = vunpack.c.h.b16 %v658
      %v1363 = vunpack.c.l.b16 %v659
      %v1364 = vunpack.c.h.b16 %v659
      %v1365 = vunpack.c.l.b16 %v660
      %v1366 = vunpack.c.h.b16 %v660
      %v1367 = vunpack.c.l.b16 %v661
      %v1368 = vunpack.c.h.b16 %v661
      %v1369 = vunpack.c.l.b16 %v662
      %v1370 = vunpack.c.h.b16 %v662
      %v1371 = vunpack.c.l.b16 %v663
      %v1372 = vunpack.c.h.b16 %v663
      %v1373 = vunpack.c.l.b16 %v664
      %v1374 = vunpack.c.h.b16 %v664
      %v1375 = vunpack.c.l.b16 %v665
      %v1376 = vunpack.c.h.b16 %v665
      %v1377 = vunpack.c.l.b16 %v666
      %v1378 = vunpack.c.h.b16 %v666
      %v1379 = vunpack.c.l.b16 %v667
      %v1380 = vunpack.c.h.b16 %v667
      %v1381 = vunpack.c.l.b16 %v668
      %v1382 = vunpack.c.h.b16 %v668
      %v1383 = vunpack.c.l.b16 %v669
      %v1384 = vunpack.c.h.b16 %v669
      %v1385 = vunpack.c.l.b16 %v670
      %v1386 = vunpack.c.h.b16 %v670
      %v1387 = vunpack.c.l.b16 %v671
      %v1388 = vunpack.c.h.b16 %v671
      %v1389 = vunpack.c.l.b16 %v672
      %v1390 = vunpack.c.h.b16 %v672
      %v1391 = vunpack.c.l.b16 %v673
      %v1392 = vunpack.c.h.b16 %v673
      %v1393 = vunpack.c.l.b16 %v674
      %v1394 = vunpack.c.h.b16 %v674
      %v1395 = vunpack.c.l.b16 %v675
      %v1396 = vunpack.c.h.b16 %v675
      %v1397 = vunpack.c.l.b16 %v676
      %v1398 = vunpack.c.h.b16 %v676
      %v1399 = vunpack.c.l.b16 %v677
      %v1400 = vunpack.c.h.b16 %v677
      %v1401 = vunpack.c.l.b16 %v678
      %v1402 = vunpack.c.h.b16 %v678
      %v1403 = vunpack.c.l.b16 %v679
      %v1404 = vunpack.c.h.b16 %v679
      %v1405 = vunpack.c.l.b16 %v680
      %v1406 = vunpack.c.h.b16 %v680
      %v1407 = vunpack.c.l.b16 %v681
      %v1408 = vunpack.c.h.b16 %v681
      %v1409 = vunpack.c.l.b16 %v682
      %v1410 = vunpack.c.h.b16 %v682
      %v1411 = vunpack.c.l.b16 %v683
      %v1412 = vunpack.c.h.b16 %v683
      %v1413 = vunpack.c.l.b16 %v684
      %v1414 = vunpack.c.h.b16 %v684
      %v1415 = vunpack.c.l.b16 %v685
      %v1416 = vunpack.c.h.b16 %v685
      %v1417 = vunpack.c.l.b16 %v686
      %v1418 = vunpack.c.h.b16 %v686
      %v1419 = vunpack.c.l.b16 %v687
      %v1420 = vunpack.c.h.b16 %v687
      %v1421 = vunpack.c.l.b16 %v688
      %v1422 = vunpack.c.h.b16 %v688
      %v1423 = vunpack.c.l.b16 %v689
      %v1424 = vunpack.c.h.b16 %v689
      %v1425 = vunpack.c.l.b16 %v690
      %v1426 = vunpack.c.h.b16 %v690
      %v1427 = vunpack.c.l.b16 %v691
      %v1428 = vunpack.c.h.b16 %v691
      %v1429 = vunpack.c.l.b16 %v692
      %v1430 = vunpack.c.h.b16 %v692
      %v1431 = vunpack.c.l.b16 %v693
      %v1432 = vunpack.c.h.b16 %v693
      %v1433 = vunpack.c.l.b16 %v694
      %v1434 = vunpack.c.h.b16 %v694
      %v1435 = vunpack.c.l.b16 %v695
      %v1436 = vunpack.c.h.b16 %v695
      %v1437 = vunpack.c.l.b16 %v696
      %v1438 = vunpack.c.h.b16 %v696
      %v1439 = vunpack.c.l.b16 %v697
      %v1440 = vunpack.c.h.b16 %v697
      %v1441 = vunpack.c.l.b16 %v698
      %v1442 = vunpack.c.h.b16 %v698
      %v1443 = vunpack.c.l.b16 %v699
      %v1444 = vunpack.c.h.b16 %v699
      %v1445 = vunpack.c.l.b16 %v700
      %v1446 = vunpack.c.h.b16 %v700
      %v1447 = vunpack.c.l.b16 %v701
      %v1448 = vunpack.c.h.b16 %v701
      %v1449 = vunpack.c.l.b16 %v702
      %v1450 = vunpack.c.h.b16 %v702
      %v1451 = vunpack.c.l.b16 %v703
      %v1452 = vunpack.c.h.b16 %v703
      %v1453 = vunpack.c.l.b16 %v704
      %v1454 = vunpack.c.h.b16 %v704
      %v1455 = vunpack.c.l.b16 %v705
      %v1456 = vunpack.c.h.b16 %v705
      %v1457 = vunpack.c.l.b16 %v706
      %v1458 = vunpack.c.h.b16 %v706
      %v1459 = vunpack.c.l.b16 %v707
      %v1460 = vunpack.c.h.b16 %v707
      %v1461 = vunpack.c.l.b16 %v708
      %v1462 = vunpack.c.h.b16 %v708
      %v1463 = vunpack.c.l.b16 %v709
      %v1464 = vunpack.c.h.b16 %v709
      %v1465 = vunpack.c.l.b16 %v710
      %v1466 = vunpack.c.h.b16 %v710
      %v1467 = vunpack.c.l.b16 %v711
      %v1468 = vunpack.c.h.b16 %v711
      %v1469 = vunpack.c.l.b16 %v712
      %v1470 = vunpack.c.h.b16 %v712
      %v1471 = vunpack.c.l.b16 %v713
      %v1472 = vunpack.c.h.b16 %v713
      %v1473 = vunpack.c.l.b16 %v714
      %v1474 = vunpack.c.h.b16 %v714
      %v1475 = vunpack.c.l.b16 %v715
      %v1476 = vunpack.c.h.b16 %v715
      %v1477 = vunpack.c.l.b16 %v716
      %v1478 = vunpack.c.h.b16 %v716
      %v1479 = vunpack.c.l.b16 %v717
      %v1480 = vunpack.c.h.b16 %v717
      %v1481 = vunpack.c.l.b16 %v718
      %v1482 = vunpack.c.h.b16 %v718
      %v1483 = vunpack.c.l.b16 %v719
      %v1484 = vunpack.c.h.b16 %v719
      %v1485 = vunpack.c.l.b16 %v720
      %v1486 = vunpack.c.h.b16 %v720
      %v1487 = vunpack.c.l.b16 %v721
      %v1488 = vunpack.c.h.b16 %v721
      %v1489 = vunpack.c.l.b16 %v722
      %v1490 = vunpack.c.h.b16 %v722
      %v1491 = vunpack.c.l.b16 %v723
      %v1492 = vunpack.c.h.b16 %v723
      %v1493 = vunpack.c.l.b16 %v724
      %v1494 = vunpack.c.h.b16 %v724
      %v1495 = vunpack.c.l.b16 %v725
      %v1496 = vunpack.c.h.b16 %v725
      %v1497 = vunpack.c.l.b16 %v726
      %v1498 = vunpack.c.h.b16 %v726
      %v1499 = vunpack.c.l.b16 %v727
      %v1500 = vunpack.c.h.b16 %v727
      %v1501 = vunpack.c.l.b16 %v728
      %v1502 = vunpack.c.h.b16 %v728
      %v1503 = vunpack.c.l.b16 %v729
      %v1504 = vunpack.c.h.b16 %v729
      %v1505 = vunpack.c.l.b16 %v730
      %v1506 = vunpack.c.h.b16 %v730
      %v1507 = vunpack.c.l.b16 %v731
      %v1508 = vunpack.c.h.b16 %v731
      %v1509 = vunpack.c.l.b16 %v732
      %v1510 = vunpack.c.h.b16 %v732
      %v1511 = vunpack.c.l.b16 %v733
      %v1512 = vunpack.c.h.b16 %v733
      %v1513 = vunpack.c.l.b16 %v734
      %v1514 = vunpack.c.h.b16 %v734
      %v1515 = vunpack.c.l.b16 %v735
      %v1516 = vunpack.c.h.b16 %v735
      %v1517 = vunpack.c.l.b16 %v736
      %v1518 = vunpack.c.h.b16 %v736
      %v1519 = vunpack.c.l.b16 %v737
      %v1520 = vunpack.c.h.b16 %v737
      %v1521 = vunpack.c.l.b16 %v738
      %v1522 = vunpack.c.h.b16 %v738
      %v1523 = vunpack.c.l.b16 %v739
      %v1524 = vunpack.c.h.b16 %v739
      %v1525 = vunpack.c.l.b16 %v740
      %v1526 = vunpack.c.h.b16 %v740
      %v1527 = vunpack.c.l.b16 %v741
      %v1528 = vunpack.c.h.b16 %v741
      %v1529 = vunpack.c.l.b16 %v742
      %v1530 = vunpack.c.h.b16 %v742
      %v1531 = vunpack.c.l.b16 %v743
      %v1532 = vunpack.c.h.b16 %v743
      %v1533 = vunpack.c.l.b16 %v744
      %v1534 = vunpack.c.h.b16 %v744
      %v1535 = vunpack.c.l.b16 %v745
      %v1536 = vunpack.c.h.b16 %v745
      %v1537 = vunpack.c.l.b16 %v746
      %v1538 = vunpack.c.h.b16 %v746
      %v1539 = vunpack.c.l.b16 %v747
      %v1540 = vunpack.c.h.b16 %v747
      %v1541 = vunpack.c.l.b16 %v748
      %v1542 = vunpack.c.h.b16 %v748
      %v1543 = vunpack.c.l.b16 %v749
      %v1544 = vunpack.c.h.b16 %v749
      %v1545 = vunpack.c.l.b16 %v750
      %v1546 = vunpack.c.h.b16 %v750
      %v1547 = vunpack.c.l.b16 %v751
      %v1548 = vunpack.c.h.b16 %v751
      %v1549 = vunpack.c.l.b16 %v752
      %v1550 = vunpack.c.h.b16 %v752
      %v1551 = vunpack.c.l.b16 %v753
      %v1552 = vunpack.c.h.b16 %v753
      %v1553 = vunpack.c.l.b16 %v754
      %v1554 = vunpack.c.h.b16 %v754
      %v1555 = vunpack.c.l.b16 %v755
      %v1556 = vunpack.c.h.b16 %v755
      %v1557 = vunpack.c.l.b16 %v756
      %v1558 = vunpack.c.h.b16 %v756
      %v1559 = vunpack.c.l.b16 %v757
      %v1560 = vunpack.c.h.b16 %v757
      %v1561 = vunpack.c.l.b16 %v758
      %v1562 = vunpack.c.h.b16 %v758
      %v1563 = vunpack.c.l.b16 %v759
      %v1564 = vunpack.c.h.b16 %v759
      %v1565 = vunpack.c.l.b16 %v760
      %v1566 = vunpack.c.h.b16 %v760
      %v1567 = vunpack.c.l.b16 %v761
      %v1568 = vunpack.c.h.b16 %v761
      %v1569 = vunpack.c.l.b16 %v762
      %v1570 = vunpack.c.h.b16 %v762
      %v1571 = vunpack.c.l.b16 %v763
      %v1572 = vunpack.c.h.b16 %v763
      %v1573 = vunpack.c.l.b16 %v764
      %v1574 = vunpack.c.h.b16 %v764
      %v1575 = vunpack.c.l.b16 %v765
      %v1576 = vunpack.c.h.b16 %v765
      %v1577 = vunpack.c.l.b16 %v766
      %v1578 = vunpack.c.h.b16 %v766
      %v1579 = vunpack.c.l.b16 %v767
      %v1580 = vunpack.c.h.b16 %v767
      %v1581 = vunpack.c.l.b16 %v768
      %v1582 = vunpack.c.h.b16 %v768
      %v1583 = vunpack.c.l.b16 %v769
      %v1584 = vunpack.c.h.b16 %v769
      %v1585 = vunpack.c.l.b16 %v770
      %v1586 = vunpack.c.h.b16 %v770
      %v1587 = vunpack.c.l.b16 %v771
      %v1588 = vunpack.c.h.b16 %v771
      %v1589 = vunpack.c.l.b16 %v772
      %v1590 = vunpack.c.h.b16 %v772
      %v1591 = vunpack.c.l.b16 %v773
      %v1592 = vunpack.c.h.b16 %v773
      %v1593 = vunpack.c.l.b16 %v774
      %v1594 = vunpack.c.h.b16 %v774
      %v1595 = vunpack.c.l.b16 %v775
      %v1596 = vunpack.c.h.b16 %v775
      %v1597 = vunpack.c.l.b16 %v776
      %v1598 = vunpack.c.h.b16 %v776
      %v1599 = vunpack.c.l.b16 %v777
      %v1600 = vunpack.c.h.b16 %v777
      %v1601 = vunpack.c.l.b16 %v778
      %v1602 = vunpack.c.h.b16 %v778
      %v1603 = vunpack.c.l.b16 %v779
      %v1604 = vunpack.c.h.b16 %v779
      %v1605 = vunpack.c.l.b16 %v780
      %v1606 = vunpack.c.h.b16 %v780
      %v1607 = vunpack.c.l.b16 %v781
      %v1608 = vunpack.c.h.b16 %v781
      %v1609 = vunpack.c.l.b16 %v782
      %v1610 = vunpack.c.h.b16 %v782
      %v1611 = vunpack.c.l.b16 %v783
      %v1612 = vunpack.c.h.b16 %v783
      %v1613 = vunpack.c.l.b16 %v784
      %v1614 = vunpack.c.h.b16 %v784
      %v1615 = vunpack.c.l.b16 %v785
      %v1616 = vunpack.c.h.b16 %v785
      %v1617 = vunpack.c.l.b16 %v786
      %v1618 = vunpack.c.h.b16 %v786
      %v1619 = vunpack.c.l.b16 %v787
      %v1620 = vunpack.c.h.b16 %v787
      %v1621 = vunpack.c.l.b16 %v788
      %v1622 = vunpack.c.h.b16 %v788
      %v1623 = vunpack.c.l.b16 %v789
      %v1624 = vunpack.c.h.b16 %v789
      %v1625 = vunpack.c.l.b16 %v790
      %v1626 = vunpack.c.h.b16 %v790
      %v1627 = vunpack.c.l.b16 %v791
      %v1628 = vunpack.c.h.b16 %v791
      %v1629 = vunpack.c.l.b16 %v792
      %v1630 = vunpack.c.h.b16 %v792
      %v1631 = vunpack.c.l.b16 %v793
      %v1632 = vunpack.c.h.b16 %v793
      %v1633 = vunpack.c.l.b16 %v794
      %v1634 = vunpack.c.h.b16 %v794
      %v1635 = vunpack.c.l.b16 %v795
      %v1636 = vunpack.c.h.b16 %v795
      %v1637 = vunpack.c.l.b16 %v796
      %v1638 = vunpack.c.h.b16 %v796
      %v1639 = vunpack.c.l.b16 %v797
      %v1640 = vunpack.c.h.b16 %v797
      %v1641 = vunpack.c.l.b16 %v798
      %v1642 = vunpack.c.h.b16 %v798
      %v1643 = vunpack.c.l.b16 %v799
      %v1644 = vunpack.c.h.b16 %v799
      %v1645 = vunpack.c.l.b16 %v800
      %v1646 = vunpack.c.h.b16 %v800
      %v1647 = vunpack.c.l.b16 %v801
      %v1648 = vunpack.c.h.b16 %v801
      %v1649 = vunpack.c.l.b16 %v802
      %v1650 = vunpack.c.h.b16 %v802
      %v1651 = vunpack.c.l.b16 %v803
      %v1652 = vunpack.c.h.b16 %v803
      %v1653 = vunpack.c.l.b16 %v804
      %v1654 = vunpack.c.h.b16 %v804
      %v1655 = vunpack.c.l.b16 %v805
      %v1656 = vunpack.c.h.b16 %v805
      %v1657 = vpack.c.b16 %v1277, %v1273
      %v1658 = vpack.c.b16 %v1278, %v1274
      %v1659 = vpack.c.b16 %v1279, %v1275
      %v1660 = vpack.c.b16 %v1280, %v1276
      %v1661 = vpack.c.b16 %v1285, %v1281
      %v1662 = vpack.c.b16 %v1286, %v1282
      %v1663 = vpack.c.b16 %v1287, %v1283
      %v1664 = vpack.c.b16 %v1288, %v1284
      %v1665 = vpack.c.b16 %v1293, %v1289
      %v1666 = vpack.c.b16 %v1294, %v1290
      %v1667 = vpack.c.b16 %v1295, %v1291
      %v1668 = vpack.c.b16 %v1296, %v1292
      %v1669 = vpack.c.b16 %v1301, %v1297
      %v1670 = vpack.c.b16 %v1302, %v1298
      %v1671 = vpack.c.b16 %v1303, %v1299
      %v1672 = vpack.c.b16 %v1304, %v1300
      %v1673 = vpack.c.b16 %v1309, %v1305
      %v1674 = vpack.c.b16 %v1310, %v1306
      %v1675 = vpack.c.b16 %v1311, %v1307
      %v1676 = vpack.c.b16 %v1312, %v1308
      %v1677 = vpack.c.b16 %v1317, %v1313
      %v1678 = vpack.c.b16 %v1318, %v1314
      %v1679 = vpack.c.b16 %v1319, %v1315
      %v1680 = vpack.c.b16 %v1320, %v1316
      %v1681 = vpack.c.b16 %v1325, %v1321
      %v1682 = vpack.c.b16 %v1326, %v1322
      %v1683 = vpack.c.b16 %v1327, %v1323
      %v1684 = vpack.c.b16 %v1328, %v1324
      %v1685 = vpack.c.b16 %v1333, %v1329
      %v1686 = vpack.c.b16 %v1334, %v1330
      %v1687 = vpack.c.b16 %v1335, %v1331
      %v1688 = vpack.c.b16 %v1336, %v1332
      %v1689 = vpack.c.b16 %v1341, %v1337
      %v1690 = vpack.c.b16 %v1342, %v1338
      %v1691 = vpack.c.b16 %v1343, %v1339
      %v1692 = vpack.c.b16 %v1344, %v1340
      %v1693 = vpack.c.b16 %v1349, %v1345
      %v1694 = vpack.c.b16 %v1350, %v1346
      %v1695 = vpack.c.b16 %v1351, %v1347
      %v1696 = vpack.c.b16 %v1352, %v1348
      %v1697 = vpack.c.b16 %v1357, %v1353
      %v1698 = vpack.c.b16 %v1358, %v1354
      %v1699 = vpack.c.b16 %v1359, %v1355
      %v1700 = vpack.c.b16 %v1360, %v1356
      %v1701 = vpack.c.b16 %v1365, %v1361
      %v1702 = vpack.c.b16 %v1366, %v1362
      %v1703 = vpack.c.b16 %v1367, %v1363
      %v1704 = vpack.c.b16 %v1368, %v1364
      %v1705 = vpack.c.b16 %v1373, %v1369
      %v1706 = vpack.c.b16 %v1374, %v1370
      %v1707 = vpack.c.b16 %v1375, %v1371
      %v1708 = vpack.c.b16 %v1376, %v1372
      %v1709 = vpack.c.b16 %v1381, %v1377
      %v1710 = vpack.c.b16 %v1382, %v1378
      %v1711 = vpack.c.b16 %v1383, %v1379
      %v1712 = vpack.c.b16 %v1384, %v1380
      %v1713 = vpack.c.b16 %v1389, %v1385
      %v1714 = vpack.c.b16 %v1390, %v1386
      %v1715 = vpack.c.b16 %v1391, %v1387
      %v1716 = vpack.c.b16 %v1392, %v1388
      %v1717 = vpack.c.b16 %v1397, %v1393
      %v1718 = vpack.c.b16 %v1398, %v1394
      %v1719 = vpack.c.b16 %v1399, %v1395
      %v1720 = vpack.c.b16 %v1400, %v1396
      %v1721 = vpack.c.b16 %v1405, %v1401
      %v1722 = vpack.c.b16 %v1406, %v1402
      %v1723 = vpack.c.b16 %v1407, %v1403
      %v1724 = vpack.c.b16 %v1408, %v1404
      %v1725 = vpack.c.b16 %v1413, %v1409
      %v1726 = vpack.c.b16 %v1414, %v1410
      %v1727 = vpack.c.b16 %v1415, %v1411
      %v1728 = vpack.c.b16 %v1416, %v1412
      %v1729 = vpack.c.b16 %v1421, %v1417
      %v1730 = vpack.c.b16 %v1422, %v1418
      %v1731 = vpack.c.b16 %v1423, %v1419
      %v1732 = vpack.c.b16 %v1424, %v1420
      %v1733 = vpack.c.b16 %v1429, %v1425
      %v1734 = vpack.c.b16 %v1430, %v1426
      %v1735 = vpack.c.b16 %v1431, %v1427
      %v1736 = vpack.c.b16 %v1432, %v1428
      %v1737 = vpack.c.b16 %v1437, %v1433
      %v1738 = vpack.c.b16 %v1438, %v1434
      %v1739 = vpack.c.b16 %v1439, %v1435
      %v1740 = vpack.c.b16 %v1440, %v1436
      %v1741 = vpack.c.b16 %v1445, %v1441
      %v1742 = vpack.c.b16 %v1446, %v1442
      %v1743 = vpack.c.b16 %v1447, %v1443
      %v1744 = vpack.c.b16 %v1448, %v1444
      %v1745 = vpack.c.b16 %v1453, %v1449
      %v1746 = vpack.c.b16 %v1454, %v1450
      %v1747 = vpack.c.b16 %v1455, %v1451
      %v1748 = vpack.c.b16 %v1456, %v1452
      %v1749 = vpack.c.b16 %v1461, %v1457
      %v1750 = vpack.c.b16 %v1462, %v1458
      %v1751 = vpack.c.b16 %v1463, %v1459
      %v1752 = vpack.c.b16 %v1464, %v1460
      %v1753 = vpack.c.b16 %v1469, %v1465
      %v1754 = vpack.c.b16 %v1470, %v1466
      %v1755 = vpack.c.b16 %v1471, %v1467
      %v1756 = vpack.c.b16 %v1472, %v1468
      %v1757 = vpack.c.b16 %v1477, %v1473
      %v1758 = vpack.c.b16 %v1478, %v1474
      %v1759 = vpack.c.b16 %v1479, %v1475
      %v1760 = vpack.c.b16 %v1480, %v1476
      %v1761 = vpack.c.b16 %v1485, %v1481
      %v1762 = vpack.c.b16 %v1486, %v1482
      %v1763 = vpack.c.b16 %v1487, %v1483
      %v1764 = vpack.c.b16 %v1488, %v1484
      %v1765 = vpack.c.b16 %v1493, %v1489
      %v1766 = vpack.c.b16 %v1494, %v1490
      %v1767 = vpack.c.b16 %v1495, %v1491
      %v1768 = vpack.c.b16 %v1496, %v1492
      %v1769 = vpack.c.b16 %v1501, %v1497
      %v1770 = vpack.c.b16 %v1502, %v1498
      %v1771 = vpack.c.b16 %v1503, %v1499
      %v1772 = vpack.c.b16 %v1504, %v1500
      %v1773 = vpack.c.b16 %v1509, %v1505
      %v1774 = vpack.c.b16 %v1510, %v1506
      %v1775 = vpack.c.b16 %v1511, %v1507
      %v1776 = vpack.c.b16 %v1512, %v1508
      %v1777 = vpack.c.b16 %v1517, %v1513
      %v1778 = vpack.c.b16 %v1518, %v1514
      %v1779 = vpack.c.b16 %v1519, %v1515
      %v1780 = vpack.c.b16 %v1520, %v1516
      %v1781 = vpack.c.b16 %v1525, %v1521
      %v1782 = vpack.c.b16 %v1526, %v1522
      %v1783 = vpack.c.b16 %v1527, %v1523
      %v1784 = vpack.c.b16 %v1528, %v1524
      %v1785 = vpack.c.b16 %v1533, %v1529
      %v1786 = vpack.c.b16 %v1534, %v1530
      %v1787 = vpack.c.b16 %v1535, %v1531
      %v1788 = vpack.c.b16 %v1536, %v1532
      %v1789 = vpack.c.b16 %v1541, %v1537
      %v1790 = vpack.c.b16 %v1542, %v1538
      %v1791 = vpack.c.b16 %v1543, %v1539
      %v1792 = vpack.c.b16 %v1544, %v1540
      %v1793 = vpack.c.b16 %v1549, %v1545
      %v1794 = vpack.c.b16 %v1550, %v1546
      %v1795 = vpack.c.b16 %v1551, %v1547
      %v1796 = vpack.c.b16 %v1552, %v1548
      %v1797 = vpack.c.b16 %v1557, %v1553
      %v1798 = vpack.c.b16 %v1558, %v1554
      %v1799 = vpack.c.b16 %v1559, %v1555
      %v1800 = vpack.c.b16 %v1560, %v1556
      %v1801 = vpack.c.b16 %v1565, %v1561
      %v1802 = vpack.c.b16 %v1566, %v1562
      %v1803 = vpack.c.b16 %v1567, %v1563
      %v1804 = vpack.c.b16 %v1568, %v1564
      %v1805 = vpack.c.b16 %v1573, %v1569
      %v1806 = vpack.c.b16 %v1574, %v1570
      %v1807 = vpack.c.b16 %v1575, %v1571
      %v1808 = vpack.c.b16 %v1576, %v1572
      %v1809 = vpack.c.b16 %v1581, %v1577
      %v1810 = vpack.c.b16 %v1582, %v1578
      %v1811 = vpack.c.b16 %v1583, %v1579
      %v1812 = vpack.c.b16 %v1584, %v1580
      %v1813 = vpack.c.b16 %v1589, %v1585
      %v1814 = vpack.c.b16 %v1590, %v1586
      %v1815 = vpack.c.b16 %v1591, %v1587
      %v1816 = vpack.c.b16 %v1592, %v1588
      %v1817 = vpack.c.b16 %v1597, %v1593
      %v1818 = vpack.c.b16 %v1598, %v1594
      %v1819 = vpack.c.b16 %v1599, %v1595
      %v1820 = vpack.c.b16 %v1600, %v1596
      %v1821 = vpack.c.b16 %v1605, %v1601
      %v1822 = vpack.c.b16 %v1606, %v1602
      %v1823 = vpack.c.b16 %v1607, %v1603
      %v1824 = vpack.c.b16 %v1608, %v1604
      %v1825 = vpack.c.b16 %v1613, %v1609
      %v1826 = vpack.c.b16 %v1614, %v1610
      %v1827 = vpack.c.b16 %v1615, %v1611
      %v1828 = vpack.c.b16 %v1616, %v1612
      %v1829 = vpack.c.b16 %v1621, %v1617
      %v1830 = vpack.c.b16 %v1622, %v1618
      %v1831 = vpack.c.b16 %v1623, %v1619
      %v1832 = vpack.c.b16 %v1624, %v1620
      %v1833 = vpack.c.b16 %v1629, %v1625
      %v1834 = vpack.c.b16 %v1630, %v1626
      %v1835 = vpack.c.b16 %v1631, %v1627
      %v1836 = vpack.c.b16 %v1632, %v1628
      %v1837 = vpack.c.b16 %v1637, %v1633
      %v1838 = vpack.c.b16 %v1638, %v1634
      %v1839 = vpack.c.b16 %v1639, %v1635
      %v1840 = vpack.c.b16 %v1640, %v1636
      %v1841 = vpack.c.b16 %v1645, %v1641
      %v1842 = vpack.c.b16 %v1646, %v1642
      %v1843 = vpack.c.b16 %v1647, %v1643
      %v1844 = vpack.c.b16 %v1648, %v1644
      %v1845 = vpack.c.b16 %v1653, %v1649
      %v1846 = vpack.c.b16 %v1654, %v1650
      %v1847 = vpack.c.b16 %v1655, %v1651
      %v1848 = vpack.c.b16 %v1656, %v1652
      %2041 = vmatprep.subr.bf16.mxu0 %v1686
      %2042 = vmatpush1.bf16.msra.mxu0 %v1685
      %2043 = vmatprep.subr.bf16.mxu0 %v1682
      %2044 = vmatpush1.bf16.msra.mxu0 %v1681
      %2045 = vmatprep.subr.bf16.mxu0 %v1678
      %2046 = vmatpush1.bf16.msra.mxu0 %v1677
      %2047 = vmatprep.subr.bf16.mxu0 %v1674
      %2048 = vmatpush1.bf16.msra.mxu0 %v1673
      %2049 = vmatprep.subr.bf16.mxu0 %v1670
      %2050 = vmatpush1.bf16.msra.mxu0 %v1669
      %2051 = vmatprep.subr.bf16.mxu0 %v1666
      %2052 = vmatpush1.bf16.msra.mxu0 %v1665
      %2053 = vmatprep.subr.bf16.mxu0 %v1662
      %2054 = vmatpush1.bf16.msra.mxu0 %v1661
      %2055 = vmatprep.subr.bf16.mxu0 %v1658
      %2056 = vmatpush1.bf16.msra.mxu0 %v1657
      %2057 = vmatprep.subr.bf16.mxu0 %v1718
      %2058 = vmatpush2.bf16.msra.mxu0 %v1717
      %2059 = vmatprep.subr.bf16.mxu0 %v1714
      %2060 = vmatpush2.bf16.msra.mxu0 %v1713
      %2061 = vmatprep.subr.bf16.mxu0 %v1710
      %2062 = vmatpush2.bf16.msra.mxu0 %v1709
      %2063 = vmatprep.subr.bf16.mxu0 %v1706
      %2064 = vmatpush2.bf16.msra.mxu0 %v1705
      %2065 = vmatprep.subr.bf16.mxu0 %v1702
      %2066 = vmatpush2.bf16.msra.mxu0 %v1701
      %2067 = vmatprep.subr.bf16.mxu0 %v1698
      %2068 = vmatpush2.bf16.msra.mxu0 %v1697
      %2069 = vmatprep.subr.bf16.mxu0 %v1694
      %2070 = vmatpush2.bf16.msra.mxu0 %v1693
      %2071 = vmatprep.subr.bf16.mxu0 %v1690
      %2072 = vmatpush2.bf16.msra.mxu0 %v1689
      %2073 = vmatprep.mubr.bf16.mxu0 %v609
      %2074 = vmatmul.mubr.bf16.gmra.mxu0 %v608
      %v2075 = vpop.f32.mrf.mxu0
      %v2076 = vadd.f32 %v1034, %v2075
      %v2077 = vpop.f32.mrf.mxu0
      %v2078 = vadd.f32 %v1036, %v2077
      %v2079 = vpop.f32.mrf.mxu0
      %v2080 = vpop.f32.mrf.mxu0
      %2081 = vdwg.mxu0
      %2082 = vmatprep.subr.bf16.mxu0 %v1750
      %2083 = vmatpush1.bf16.msra.mxu0 %v1749
      %2084 = vmatprep.subr.bf16.mxu0 %v1746
      %2085 = vmatpush1.bf16.msra.mxu0 %v1745
      %2086 = vmatprep.subr.bf16.mxu0 %v1742
      %2087 = vmatpush1.bf16.msra.mxu0 %v1741
      %2088 = vmatprep.subr.bf16.mxu0 %v1738
      %2089 = vmatpush1.bf16.msra.mxu0 %v1737
      %2090 = vmatprep.subr.bf16.mxu0 %v1734
      %2091 = vmatpush1.bf16.msra.mxu0 %v1733
      %2092 = vmatprep.subr.bf16.mxu0 %v1730
      %2093 = vmatpush1.bf16.msra.mxu0 %v1729
      %2094 = vmatprep.subr.bf16.mxu0 %v1726
      %2095 = vmatpush1.bf16.msra.mxu0 %v1725
      %2096 = vmatprep.subr.bf16.mxu0 %v1722
      %2097 = vmatpush1.bf16.msra.mxu0 %v1721
      %2098 = vmatprep.subr.bf16.mxu0 %v1782
      %2099 = vmatpush2.bf16.msra.mxu0 %v1781
      %2100 = vmatprep.subr.bf16.mxu0 %v1778
      %2101 = vmatpush2.bf16.msra.mxu0 %v1777
      %2102 = vmatprep.subr.bf16.mxu0 %v1774
      %2103 = vmatpush2.bf16.msra.mxu0 %v1773
      %2104 = vmatprep.subr.bf16.mxu0 %v1770
      %2105 = vmatpush2.bf16.msra.mxu0 %v1769
      %2106 = vmatprep.subr.bf16.mxu0 %v1766
      %2107 = vmatpush2.bf16.msra.mxu0 %v1765
      %2108 = vmatprep.subr.bf16.mxu0 %v1762
      %2109 = vmatpush2.bf16.msra.mxu0 %v1761
      %2110 = vmatprep.subr.bf16.mxu0 %v1758
      %2111 = vmatpush2.bf16.msra.mxu0 %v1757
      %2112 = vmatprep.subr.bf16.mxu0 %v1754
      %2113 = vmatpush2.bf16.msra.mxu0 %v1753
      %2114 = vmatprep.mubr.bf16.mxu0 %v611
      %2115 = vmatmul.mubr.bf16.gmra.mxu0 %v610
      %v2116 = vpop.f32.mrf.mxu0
      %v2117 = vadd.f32 %v2076, %v2116
      %v2118 = vpop.f32.mrf.mxu0
      %v2119 = vadd.f32 %v2078, %v2118
      %v2120 = vpop.f32.mrf.mxu0
      %v2121 = vpop.f32.mrf.mxu0
      %2122 = vdwg.mxu0
      %2123 = vmatprep.subr.bf16.mxu0 %v1814
      %2124 = vmatpush1.bf16.msra.mxu0 %v1813
      %2125 = vmatprep.subr.bf16.mxu0 %v1810
      %2126 = vmatpush1.bf16.msra.mxu0 %v1809
      %2127 = vmatprep.subr.bf16.mxu0 %v1806
      %2128 = vmatpush1.bf16.msra.mxu0 %v1805
      %2129 = vmatprep.subr.bf16.mxu0 %v1802
      %2130 = vmatpush1.bf16.msra.mxu0 %v1801
      %2131 = vmatprep.subr.bf16.mxu0 %v1798
      %2132 = vmatpush1.bf16.msra.mxu0 %v1797
      %2133 = vmatprep.subr.bf16.mxu0 %v1794
      %2134 = vmatpush1.bf16.msra.mxu0 %v1793
      %2135 = vmatprep.subr.bf16.mxu0 %v1790
      %2136 = vmatpush1.bf16.msra.mxu0 %v1789
      %2137 = vmatprep.subr.bf16.mxu0 %v1786
      %2138 = vmatpush1.bf16.msra.mxu0 %v1785
      %2139 = vmatprep.subr.bf16.mxu0 %v1846
      %2140 = vmatpush2.bf16.msra.mxu0 %v1845
      %2141 = vmatprep.subr.bf16.mxu0 %v1842
      %2142 = vmatpush2.bf16.msra.mxu0 %v1841
      %2143 = vmatprep.subr.bf16.mxu0 %v1838
      %2144 = vmatpush2.bf16.msra.mxu0 %v1837
      %2145 = vmatprep.subr.bf16.mxu0 %v1834
      %2146 = vmatpush2.bf16.msra.mxu0 %v1833
      %2147 = vmatprep.subr.bf16.mxu0 %v1830
      %2148 = vmatpush2.bf16.msra.mxu0 %v1829
      %2149 = vmatprep.subr.bf16.mxu0 %v1826
      %2150 = vmatpush2.bf16.msra.mxu0 %v1825
      %2151 = vmatprep.subr.bf16.mxu0 %v1822
      %2152 = vmatpush2.bf16.msra.mxu0 %v1821
      %2153 = vmatprep.subr.bf16.mxu0 %v1818
      %2154 = vmatpush2.bf16.msra.mxu0 %v1817
      %2155 = vmatprep.mubr.bf16.mxu0 %v613
      %2156 = vmatmul.mubr.bf16.gmra.mxu0 %v612
      %v2157 = vpop.f32.mrf.mxu0
      %v2158 = vadd.f32 %v2117, %v2157
      %v2159 = vpop.f32.mrf.mxu0
      %v2160 = vadd.f32 %v2119, %v2159
      %v2161 = vpop.f32.mrf.mxu0
      %v2162 = vpop.f32.mrf.mxu0
      %2163 = vdwg.mxu0
      %2164 = vmatprep.subr.bf16.mxu0 %v1688
      %2165 = vmatpush1.bf16.msra.mxu0 %v1687
      %2166 = vmatprep.subr.bf16.mxu0 %v1684
      %2167 = vmatpush1.bf16.msra.mxu0 %v1683
      %2168 = vmatprep.subr.bf16.mxu0 %v1680
      %2169 = vmatpush1.bf16.msra.mxu0 %v1679
      %2170 = vmatprep.subr.bf16.mxu0 %v1676
      %2171 = vmatpush1.bf16.msra.mxu0 %v1675
      %2172 = vmatprep.subr.bf16.mxu0 %v1672
      %2173 = vmatpush1.bf16.msra.mxu0 %v1671
      %2174 = vmatprep.subr.bf16.mxu0 %v1668
      %2175 = vmatpush1.bf16.msra.mxu0 %v1667
      %2176 = vmatprep.subr.bf16.mxu0 %v1664
      %2177 = vmatpush1.bf16.msra.mxu0 %v1663
      %2178 = vmatprep.subr.bf16.mxu0 %v1660
      %2179 = vmatpush1.bf16.msra.mxu0 %v1659
      %2180 = vmatprep.subr.bf16.mxu0 %v1720
      %2181 = vmatpush2.bf16.msra.mxu0 %v1719
      %2182 = vmatprep.subr.bf16.mxu0 %v1716
      %2183 = vmatpush2.bf16.msra.mxu0 %v1715
      %2184 = vmatprep.subr.bf16.mxu0 %v1712
      %2185 = vmatpush2.bf16.msra.mxu0 %v1711
      %2186 = vmatprep.subr.bf16.mxu0 %v1708
      %2187 = vmatpush2.bf16.msra.mxu0 %v1707
      %2188 = vmatprep.subr.bf16.mxu0 %v1704
      %2189 = vmatpush2.bf16.msra.mxu0 %v1703
      %2190 = vmatprep.subr.bf16.mxu0 %v1700
      %2191 = vmatpush2.bf16.msra.mxu0 %v1699
      %2192 = vmatprep.subr.bf16.mxu0 %v1696
      %2193 = vmatpush2.bf16.msra.mxu0 %v1695
      %2194 = vmatprep.subr.bf16.mxu0 %v1692
      %2195 = vmatpush2.bf16.msra.mxu0 %v1691
      %2196 = vmatprep.mubr.bf16.mxu0 %v609
      %2197 = vmatmul.mubr.bf16.gmra.mxu0 %v608
      %v2198 = vpop.f32.mrf.mxu0
      %v2199 = vadd.f32 %v1075, %v2198
      %v2200 = vpop.f32.mrf.mxu0
      %v2201 = vadd.f32 %v1077, %v2200
      %v2202 = vpop.f32.mrf.mxu0
      %v2203 = vpop.f32.mrf.mxu0
      %2204 = vdwg.mxu0
      %2205 = vmatprep.subr.bf16.mxu0 %v1752
      %2206 = vmatpush1.bf16.msra.mxu0 %v1751
      %2207 = vmatprep.subr.bf16.mxu0 %v1748
      %2208 = vmatpush1.bf16.msra.mxu0 %v1747
      %2209 = vmatprep.subr.bf16.mxu0 %v1744
      %2210 = vmatpush1.bf16.msra.mxu0 %v1743
      %2211 = vmatprep.subr.bf16.mxu0 %v1740
      %2212 = vmatpush1.bf16.msra.mxu0 %v1739
      %2213 = vmatprep.subr.bf16.mxu0 %v1736
      %2214 = vmatpush1.bf16.msra.mxu0 %v1735
      %2215 = vmatprep.subr.bf16.mxu0 %v1732
      %2216 = vmatpush1.bf16.msra.mxu0 %v1731
      %2217 = vmatprep.subr.bf16.mxu0 %v1728
      %2218 = vmatpush1.bf16.msra.mxu0 %v1727
      %2219 = vmatprep.subr.bf16.mxu0 %v1724
      %2220 = vmatpush1.bf16.msra.mxu0 %v1723
      %2221 = vmatprep.subr.bf16.mxu0 %v1784
      %2222 = vmatpush2.bf16.msra.mxu0 %v1783
      %2223 = vmatprep.subr.bf16.mxu0 %v1780
      %2224 = vmatpush2.bf16.msra.mxu0 %v1779
      %2225 = vmatprep.subr.bf16.mxu0 %v1776
      %2226 = vmatpush2.bf16.msra.mxu0 %v1775
      %2227 = vmatprep.subr.bf16.mxu0 %v1772
      %2228 = vmatpush2.bf16.msra.mxu0 %v1771
      %2229 = vmatprep.subr.bf16.mxu0 %v1768
      %2230 = vmatpush2.bf16.msra.mxu0 %v1767
      %2231 = vmatprep.subr.bf16.mxu0 %v1764
      %2232 = vmatpush2.bf16.msra.mxu0 %v1763
      %2233 = vmatprep.subr.bf16.mxu0 %v1760
      %2234 = vmatpush2.bf16.msra.mxu0 %v1759
      %2235 = vmatprep.subr.bf16.mxu0 %v1756
      %2236 = vmatpush2.bf16.msra.mxu0 %v1755
      %2237 = vmatprep.mubr.bf16.mxu0 %v611
      %2238 = vmatmul.mubr.bf16.gmra.mxu0 %v610
      %v2239 = vpop.f32.mrf.mxu0
      %v2240 = vadd.f32 %v2199, %v2239
      %v2241 = vpop.f32.mrf.mxu0
      %v2242 = vadd.f32 %v2201, %v2241
      %v2243 = vpop.f32.mrf.mxu0
      %v2244 = vpop.f32.mrf.mxu0
      %2245 = vdwg.mxu0
      %2246 = vmatprep.subr.bf16.mxu0 %v1816
      %2247 = vmatpush1.bf16.msra.mxu0 %v1815
      %2248 = vmatprep.subr.bf16.mxu0 %v1812
      %2249 = vmatpush1.bf16.msra.mxu0 %v1811
      %2250 = vmatprep.subr.bf16.mxu0 %v1808
      %2251 = vmatpush1.bf16.msra.mxu0 %v1807
      %2252 = vmatprep.subr.bf16.mxu0 %v1804
      %2253 = vmatpush1.bf16.msra.mxu0 %v1803
      %2254 = vmatprep.subr.bf16.mxu0 %v1800
      %2255 = vmatpush1.bf16.msra.mxu0 %v1799
      %2256 = vmatprep.subr.bf16.mxu0 %v1796
      %2257 = vmatpush1.bf16.msra.mxu0 %v1795
      %2258 = vmatprep.subr.bf16.mxu0 %v1792
      %2259 = vmatpush1.bf16.msra.mxu0 %v1791
      %2260 = vmatprep.subr.bf16.mxu0 %v1788
      %2261 = vmatpush1.bf16.msra.mxu0 %v1787
      %2262 = vmatprep.subr.bf16.mxu0 %v1848
      %2263 = vmatpush2.bf16.msra.mxu0 %v1847
      %2264 = vmatprep.subr.bf16.mxu0 %v1844
      %2265 = vmatpush2.bf16.msra.mxu0 %v1843
      %2266 = vmatprep.subr.bf16.mxu0 %v1840
      %2267 = vmatpush2.bf16.msra.mxu0 %v1839
      %2268 = vmatprep.subr.bf16.mxu0 %v1836
      %2269 = vmatpush2.bf16.msra.mxu0 %v1835
      %2270 = vmatprep.subr.bf16.mxu0 %v1832
      %2271 = vmatpush2.bf16.msra.mxu0 %v1831
      %2272 = vmatprep.subr.bf16.mxu0 %v1828
      %2273 = vmatpush2.bf16.msra.mxu0 %v1827
      %2274 = vmatprep.subr.bf16.mxu0 %v1824
      %2275 = vmatpush2.bf16.msra.mxu0 %v1823
      %2276 = vmatprep.subr.bf16.mxu0 %v1820
      %2277 = vmatpush2.bf16.msra.mxu0 %v1819
      %2278 = vmatprep.mubr.bf16.mxu0 %v613
      %2279 = vmatmul.mubr.bf16.gmra.mxu0 %v612
      %v2280 = vpop.f32.mrf.mxu0
      %v2281 = vadd.f32 %v2240, %v2280
      %v2282 = vpop.f32.mrf.mxu0
      %v2283 = vadd.f32 %v2242, %v2282
      %v2284 = vpop.f32.mrf.mxu0
      %v2285 = vpop.f32.mrf.mxu0
      %2286 = vdwg.mxu0
      %v2287 = vld [vmem:[%s4] sm:$0xf]
      %v2289 = vlaneseq
      %v2290 = vshrl.u32 %v2289, 7
      %v2291 = vsub.s32 0, %v2290
      %v2292 = vrot.slane %v2287, %v2291
      %v2293 = vlaneseq
      %v2294 = vshrl.u32 %v2293, 7
      %v2295 = vsub.s32 1, %v2294
      %v2296 = vrot.slane %v2287, %v2295
      %v2297 = vlaneseq
      %v2298 = vshrl.u32 %v2297, 7
      %v2299 = vsub.s32 2, %v2298
      %v2300 = vrot.slane %v2287, %v2299
      %v2301 = vlaneseq
      %v2302 = vshrl.u32 %v2301, 7
      %v2303 = vsub.s32 3, %v2302
      %v2304 = vrot.slane %v2287, %v2303
      %v2309 = vadd.f32 %v2158, %v2292
      %v2310 = vadd.f32 %v2160, %v2296
      %v2311 = vadd.f32 %v2281, %v2300
      %v2312 = vadd.f32 %v2283, %v2304
      %v2313 = vmax.f32 %v2309, 0.0
      %v2314 = vmax.f32 %v2310, 0.0
      %v2315 = vmax.f32 %v2311, 0.0
      %v2316 = vmax.f32 %v2312, 0.0
      %v2317 = vpack.c.bf16 %v2313, %v2313
      %v2318 = vpack.c.bf16 %v2314, %v2314
      %v2319 = vpack.c.bf16 %v2315, %v2315
      %v2320 = vpack.c.bf16 %v2316, %v2316
      %v2321 = vld [vmem:[#allocation12] sm:$0xff]
      %v2322 = vld [vmem:[#allocation12 + $0x8] sm:$0xff]
      %v2323 = vld [vmem:[#allocation12 + $0x10] sm:$0xff]
      %v2324 = vld [vmem:[#allocation12 + $0x18] sm:$0xff]
      %v2325 = vld [vmem:[#allocation12 + $0x20] sm:$0xff]
      %v2326 = vld [vmem:[#allocation12 + $0x28] sm:$0xff]
      %v2327 = vld [vmem:[#allocation12 + $0x30] sm:$0xff]
      %v2328 = vld [vmem:[#allocation12 + $0x38] sm:$0xff]
      %v2329 = vld [vmem:[#allocation12 + $0x40] sm:$0xff]
      %v2330 = vld [vmem:[#allocation12 + $0x48] sm:$0xff]
      %v2331 = vld [vmem:[#allocation12 + $0x50] sm:$0xff]
      %v2332 = vld [vmem:[#allocation12 + $0x58] sm:$0xff]
      %v2333 = vld [vmem:[#allocation12 + $0x60] sm:$0xff]
      %v2334 = vld [vmem:[#allocation12 + $0x68] sm:$0xff]
      %v2335 = vld [vmem:[#allocation12 + $0x70] sm:$0xff]
      %v2336 = vld [vmem:[#allocation12 + $0x78] sm:$0xff]
      %v2337 = vld [vmem:[#allocation12 + $0x80] sm:$0xff]
      %v2338 = vld [vmem:[#allocation12 + $0x88] sm:$0xff]
      %v2339 = vld [vmem:[#allocation12 + $0x90] sm:$0xff]
      %v2340 = vld [vmem:[#allocation12 + $0x98] sm:$0xff]
      %v2341 = vld [vmem:[#allocation12 + $0xa0] sm:$0xff]
      %v2342 = vld [vmem:[#allocation12 + $0xa8] sm:$0xff]
      %v2343 = vld [vmem:[#allocation12 + $0xb0] sm:$0xff]
      %v2344 = vld [vmem:[#allocation12 + $0xb8] sm:$0xff]
      %v2345 = vld [vmem:[#allocation12 + $0xc0] sm:$0xff]
      %v2346 = vld [vmem:[#allocation12 + $0xc8] sm:$0xff]
      %v2347 = vld [vmem:[#allocation12 + $0xd0] sm:$0xff]
      %v2348 = vld [vmem:[#allocation12 + $0xd8] sm:$0xff]
      %v2349 = vld [vmem:[#allocation12 + $0xe0] sm:$0xff]
      %v2350 = vld [vmem:[#allocation12 + $0xe8] sm:$0xff]
      %v2351 = vld [vmem:[#allocation12 + $0xf0] sm:$0xff]
      %v2352 = vld [vmem:[#allocation12 + $0xf8] sm:$0xff]
      %v2353 = vld [vmem:[#allocation12 + $0x100] sm:$0xff]
      %v2354 = vld [vmem:[#allocation12 + $0x108] sm:$0xff]
      %v2355 = vld [vmem:[#allocation12 + $0x110] sm:$0xff]
      %v2356 = vld [vmem:[#allocation12 + $0x118] sm:$0xff]
      %v2357 = vld [vmem:[#allocation12 + $0x120] sm:$0xff]
      %v2358 = vld [vmem:[#allocation12 + $0x128] sm:$0xff]
      %v2359 = vld [vmem:[#allocation12 + $0x130] sm:$0xff]
      %v2360 = vld [vmem:[#allocation12 + $0x138] sm:$0xff]
      %v2361 = vld [vmem:[#allocation12 + $0x140] sm:$0xff]
      %v2362 = vld [vmem:[#allocation12 + $0x148] sm:$0xff]
      %v2363 = vld [vmem:[#allocation12 + $0x150] sm:$0xff]
      %v2364 = vld [vmem:[#allocation12 + $0x158] sm:$0xff]
      %v2365 = vld [vmem:[#allocation12 + $0x160] sm:$0xff]
      %v2366 = vld [vmem:[#allocation12 + $0x168] sm:$0xff]
      %v2367 = vld [vmem:[#allocation12 + $0x170] sm:$0xff]
      %v2368 = vld [vmem:[#allocation12 + $0x178] sm:$0xff]
      %v2369 = vld [vmem:[#allocation12 + $0x180] sm:$0xff]
      %v2370 = vld [vmem:[#allocation12 + $0x188] sm:$0xff]
      %v2371 = vld [vmem:[#allocation12 + $0x190] sm:$0xff]
      %v2372 = vld [vmem:[#allocation12 + $0x198] sm:$0xff]
      %v2373 = vld [vmem:[#allocation12 + $0x1a0] sm:$0xff]
      %v2374 = vld [vmem:[#allocation12 + $0x1a8] sm:$0xff]
      %v2375 = vld [vmem:[#allocation12 + $0x1b0] sm:$0xff]
      %v2376 = vld [vmem:[#allocation12 + $0x1b8] sm:$0xff]
      %v2377 = vld [vmem:[#allocation12 + $0x1c0] sm:$0xff]
      %v2378 = vld [vmem:[#allocation12 + $0x1c8] sm:$0xff]
      %v2379 = vld [vmem:[#allocation12 + $0x1d0] sm:$0xff]
      %v2380 = vld [vmem:[#allocation12 + $0x1d8] sm:$0xff]
      %v2381 = vld [vmem:[#allocation12 + $0x1e0] sm:$0xff]
      %v2382 = vld [vmem:[#allocation12 + $0x1e8] sm:$0xff]
      %v2383 = vld [vmem:[#allocation12 + $0x1f0] sm:$0xff]
      %v2384 = vld [vmem:[#allocation12 + $0x1f8] sm:$0xff]
      %v2385 = vld [vmem:[%s6] sm:$0x3]
      %v2387 = vlaneseq
      %v2388 = vshrl.u32 %v2387, 7
      %v2389 = vsub.s32 0, %v2388
      %v2390 = vrot.slane %v2385, %v2389
      %v2391 = vlaneseq
      %v2392 = vshrl.u32 %v2391, 7
      %v2393 = vsub.s32 1, %v2392
      %v2394 = vrot.slane %v2385, %v2393
      %v2461 = vunpack.c.l.b16 %v2321
      %v2462 = vunpack.c.h.b16 %v2321
      %v2463 = vunpack.c.l.b16 %v2322
      %v2464 = vunpack.c.h.b16 %v2322
      %v2465 = vunpack.c.l.b16 %v2323
      %v2466 = vunpack.c.h.b16 %v2323
      %v2467 = vunpack.c.l.b16 %v2324
      %v2468 = vunpack.c.h.b16 %v2324
      %v2469 = vunpack.c.l.b16 %v2325
      %v2470 = vunpack.c.h.b16 %v2325
      %v2471 = vunpack.c.l.b16 %v2326
      %v2472 = vunpack.c.h.b16 %v2326
      %v2473 = vunpack.c.l.b16 %v2327
      %v2474 = vunpack.c.h.b16 %v2327
      %v2475 = vunpack.c.l.b16 %v2328
      %v2476 = vunpack.c.h.b16 %v2328
      %v2477 = vunpack.c.l.b16 %v2329
      %v2478 = vunpack.c.h.b16 %v2329
      %v2479 = vunpack.c.l.b16 %v2330
      %v2480 = vunpack.c.h.b16 %v2330
      %v2481 = vunpack.c.l.b16 %v2331
      %v2482 = vunpack.c.h.b16 %v2331
      %v2483 = vunpack.c.l.b16 %v2332
      %v2484 = vunpack.c.h.b16 %v2332
      %v2485 = vunpack.c.l.b16 %v2333
      %v2486 = vunpack.c.h.b16 %v2333
      %v2487 = vunpack.c.l.b16 %v2334
      %v2488 = vunpack.c.h.b16 %v2334
      %v2489 = vunpack.c.l.b16 %v2335
      %v2490 = vunpack.c.h.b16 %v2335
      %v2491 = vunpack.c.l.b16 %v2336
      %v2492 = vunpack.c.h.b16 %v2336
      %v2493 = vunpack.c.l.b16 %v2337
      %v2494 = vunpack.c.h.b16 %v2337
      %v2495 = vunpack.c.l.b16 %v2338
      %v2496 = vunpack.c.h.b16 %v2338
      %v2497 = vunpack.c.l.b16 %v2339
      %v2498 = vunpack.c.h.b16 %v2339
      %v2499 = vunpack.c.l.b16 %v2340
      %v2500 = vunpack.c.h.b16 %v2340
      %v2501 = vunpack.c.l.b16 %v2341
      %v2502 = vunpack.c.h.b16 %v2341
      %v2503 = vunpack.c.l.b16 %v2342
      %v2504 = vunpack.c.h.b16 %v2342
      %v2505 = vunpack.c.l.b16 %v2343
      %v2506 = vunpack.c.h.b16 %v2343
      %v2507 = vunpack.c.l.b16 %v2344
      %v2508 = vunpack.c.h.b16 %v2344
      %v2509 = vunpack.c.l.b16 %v2345
      %v2510 = vunpack.c.h.b16 %v2345
      %v2511 = vunpack.c.l.b16 %v2346
      %v2512 = vunpack.c.h.b16 %v2346
      %v2513 = vunpack.c.l.b16 %v2347
      %v2514 = vunpack.c.h.b16 %v2347
      %v2515 = vunpack.c.l.b16 %v2348
      %v2516 = vunpack.c.h.b16 %v2348
      %v2517 = vunpack.c.l.b16 %v2349
      %v2518 = vunpack.c.h.b16 %v2349
      %v2519 = vunpack.c.l.b16 %v2350
      %v2520 = vunpack.c.h.b16 %v2350
      %v2521 = vunpack.c.l.b16 %v2351
      %v2522 = vunpack.c.h.b16 %v2351
      %v2523 = vunpack.c.l.b16 %v2352
      %v2524 = vunpack.c.h.b16 %v2352
      %v2525 = vunpack.c.l.b16 %v2353
      %v2526 = vunpack.c.h.b16 %v2353
      %v2527 = vunpack.c.l.b16 %v2354
      %v2528 = vunpack.c.h.b16 %v2354
      %v2529 = vunpack.c.l.b16 %v2355
      %v2530 = vunpack.c.h.b16 %v2355
      %v2531 = vunpack.c.l.b16 %v2356
      %v2532 = vunpack.c.h.b16 %v2356
      %v2533 = vunpack.c.l.b16 %v2357
      %v2534 = vunpack.c.h.b16 %v2357
      %v2535 = vunpack.c.l.b16 %v2358
      %v2536 = vunpack.c.h.b16 %v2358
      %v2537 = vunpack.c.l.b16 %v2359
      %v2538 = vunpack.c.h.b16 %v2359
      %v2539 = vunpack.c.l.b16 %v2360
      %v2540 = vunpack.c.h.b16 %v2360
      %v2541 = vunpack.c.l.b16 %v2361
      %v2542 = vunpack.c.h.b16 %v2361
      %v2543 = vunpack.c.l.b16 %v2362
      %v2544 = vunpack.c.h.b16 %v2362
      %v2545 = vunpack.c.l.b16 %v2363
      %v2546 = vunpack.c.h.b16 %v2363
      %v2547 = vunpack.c.l.b16 %v2364
      %v2548 = vunpack.c.h.b16 %v2364
      %v2549 = vunpack.c.l.b16 %v2365
      %v2550 = vunpack.c.h.b16 %v2365
      %v2551 = vunpack.c.l.b16 %v2366
      %v2552 = vunpack.c.h.b16 %v2366
      %v2553 = vunpack.c.l.b16 %v2367
      %v2554 = vunpack.c.h.b16 %v2367
      %v2555 = vunpack.c.l.b16 %v2368
      %v2556 = vunpack.c.h.b16 %v2368
      %v2557 = vunpack.c.l.b16 %v2369
      %v2558 = vunpack.c.h.b16 %v2369
      %v2559 = vunpack.c.l.b16 %v2370
      %v2560 = vunpack.c.h.b16 %v2370
      %v2561 = vunpack.c.l.b16 %v2371
      %v2562 = vunpack.c.h.b16 %v2371
      %v2563 = vunpack.c.l.b16 %v2372
      %v2564 = vunpack.c.h.b16 %v2372
      %v2565 = vunpack.c.l.b16 %v2373
      %v2566 = vunpack.c.h.b16 %v2373
      %v2567 = vunpack.c.l.b16 %v2374
      %v2568 = vunpack.c.h.b16 %v2374
      %v2569 = vunpack.c.l.b16 %v2375
      %v2570 = vunpack.c.h.b16 %v2375
      %v2571 = vunpack.c.l.b16 %v2376
      %v2572 = vunpack.c.h.b16 %v2376
      %v2573 = vunpack.c.l.b16 %v2377
      %v2574 = vunpack.c.h.b16 %v2377
      %v2575 = vunpack.c.l.b16 %v2378
      %v2576 = vunpack.c.h.b16 %v2378
      %v2577 = vunpack.c.l.b16 %v2379
      %v2578 = vunpack.c.h.b16 %v2379
      %v2579 = vunpack.c.l.b16 %v2380
      %v2580 = vunpack.c.h.b16 %v2380
      %v2581 = vunpack.c.l.b16 %v2381
      %v2582 = vunpack.c.h.b16 %v2381
      %v2583 = vunpack.c.l.b16 %v2382
      %v2584 = vunpack.c.h.b16 %v2382
      %v2585 = vunpack.c.l.b16 %v2383
      %v2586 = vunpack.c.h.b16 %v2383
      %v2587 = vunpack.c.l.b16 %v2384
      %v2588 = vunpack.c.h.b16 %v2384
      %v2589 = vpack.c.b16 %v2463, %v2461
      %v2590 = vpack.c.b16 %v2464, %v2462
      %v2591 = vpack.c.b16 %v2467, %v2465
      %v2592 = vpack.c.b16 %v2468, %v2466
      %v2593 = vpack.c.b16 %v2471, %v2469
      %v2594 = vpack.c.b16 %v2472, %v2470
      %v2595 = vpack.c.b16 %v2475, %v2473
      %v2596 = vpack.c.b16 %v2476, %v2474
      %v2597 = vpack.c.b16 %v2479, %v2477
      %v2598 = vpack.c.b16 %v2480, %v2478
      %v2599 = vpack.c.b16 %v2483, %v2481
      %v2600 = vpack.c.b16 %v2484, %v2482
      %v2601 = vpack.c.b16 %v2487, %v2485
      %v2602 = vpack.c.b16 %v2488, %v2486
      %v2603 = vpack.c.b16 %v2491, %v2489
      %v2604 = vpack.c.b16 %v2492, %v2490
      %v2605 = vpack.c.b16 %v2495, %v2493
      %v2606 = vpack.c.b16 %v2496, %v2494
      %v2607 = vpack.c.b16 %v2499, %v2497
      %v2608 = vpack.c.b16 %v2500, %v2498
      %v2609 = vpack.c.b16 %v2503, %v2501
      %v2610 = vpack.c.b16 %v2504, %v2502
      %v2611 = vpack.c.b16 %v2507, %v2505
      %v2612 = vpack.c.b16 %v2508, %v2506
      %v2613 = vpack.c.b16 %v2511, %v2509
      %v2614 = vpack.c.b16 %v2512, %v2510
      %v2615 = vpack.c.b16 %v2515, %v2513
      %v2616 = vpack.c.b16 %v2516, %v2514
      %v2617 = vpack.c.b16 %v2519, %v2517
      %v2618 = vpack.c.b16 %v2520, %v2518
      %v2619 = vpack.c.b16 %v2523, %v2521
      %v2620 = vpack.c.b16 %v2524, %v2522
      %v2621 = vpack.c.b16 %v2527, %v2525
      %v2622 = vpack.c.b16 %v2528, %v2526
      %v2623 = vpack.c.b16 %v2531, %v2529
      %v2624 = vpack.c.b16 %v2532, %v2530
      %v2625 = vpack.c.b16 %v2535, %v2533
      %v2626 = vpack.c.b16 %v2536, %v2534
      %v2627 = vpack.c.b16 %v2539, %v2537
      %v2628 = vpack.c.b16 %v2540, %v2538
      %v2629 = vpack.c.b16 %v2543, %v2541
      %v2630 = vpack.c.b16 %v2544, %v2542
      %v2631 = vpack.c.b16 %v2547, %v2545
      %v2632 = vpack.c.b16 %v2548, %v2546
      %v2633 = vpack.c.b16 %v2551, %v2549
      %v2634 = vpack.c.b16 %v2552, %v2550
      %v2635 = vpack.c.b16 %v2555, %v2553
      %v2636 = vpack.c.b16 %v2556, %v2554
      %v2637 = vpack.c.b16 %v2559, %v2557
      %v2638 = vpack.c.b16 %v2560, %v2558
      %v2639 = vpack.c.b16 %v2563, %v2561
      %v2640 = vpack.c.b16 %v2564, %v2562
      %v2641 = vpack.c.b16 %v2567, %v2565
      %v2642 = vpack.c.b16 %v2568, %v2566
      %v2643 = vpack.c.b16 %v2571, %v2569
      %v2644 = vpack.c.b16 %v2572, %v2570
      %v2645 = vpack.c.b16 %v2575, %v2573
      %v2646 = vpack.c.b16 %v2576, %v2574
      %v2647 = vpack.c.b16 %v2579, %v2577
      %v2648 = vpack.c.b16 %v2580, %v2578
      %v2649 = vpack.c.b16 %v2583, %v2581
      %v2650 = vpack.c.b16 %v2584, %v2582
      %v2651 = vpack.c.b16 %v2587, %v2585
      %v2652 = vpack.c.b16 %v2588, %v2586
      %2717 = vmatprep.subr.bf16.mxu0 %v2604
      %2718 = vmatpush1.bf16.msra.mxu0 %v2603
      %2719 = vmatprep.subr.bf16.mxu0 %v2602
      %2720 = vmatpush1.bf16.msra.mxu0 %v2601
      %2721 = vmatprep.subr.bf16.mxu0 %v2600
      %2722 = vmatpush1.bf16.msra.mxu0 %v2599
      %2723 = vmatprep.subr.bf16.mxu0 %v2598
      %2724 = vmatpush1.bf16.msra.mxu0 %v2597
      %2725 = vmatprep.subr.bf16.mxu0 %v2596
      %2726 = vmatpush1.bf16.msra.mxu0 %v2595
      %2727 = vmatprep.subr.bf16.mxu0 %v2594
      %2728 = vmatpush1.bf16.msra.mxu0 %v2593
      %2729 = vmatprep.subr.bf16.mxu0 %v2592
      %2730 = vmatpush1.bf16.msra.mxu0 %v2591
      %2731 = vmatprep.subr.bf16.mxu0 %v2590
      %2732 = vmatpush1.bf16.msra.mxu0 %v2589
      %2733 = vmatprep.subr.bf16.mxu0 %v2620
      %2734 = vmatpush2.bf16.msra.mxu0 %v2619
      %2735 = vmatprep.subr.bf16.mxu0 %v2618
      %2736 = vmatpush2.bf16.msra.mxu0 %v2617
      %2737 = vmatprep.subr.bf16.mxu0 %v2616
      %2738 = vmatpush2.bf16.msra.mxu0 %v2615
      %2739 = vmatprep.subr.bf16.mxu0 %v2614
      %2740 = vmatpush2.bf16.msra.mxu0 %v2613
      %2741 = vmatprep.subr.bf16.mxu0 %v2612
      %2742 = vmatpush2.bf16.msra.mxu0 %v2611
      %2743 = vmatprep.subr.bf16.mxu0 %v2610
      %2744 = vmatpush2.bf16.msra.mxu0 %v2609
      %2745 = vmatprep.subr.bf16.mxu0 %v2608
      %2746 = vmatpush2.bf16.msra.mxu0 %v2607
      %2747 = vmatprep.subr.bf16.mxu0 %v2606
      %2748 = vmatpush2.bf16.msra.mxu0 %v2605
      %2749 = vmatprep.mubr.bf16.mxu0 %v2318
      %2750 = vmatmul.mubr.bf16.gmra.mxu0 %v2317
      %v2751 = vpop.f32.mrf.mxu0
      %v2752 = vadd.f32 %v2390, %v2751
      %v2753 = vpop.f32.mrf.mxu0
      %v2754 = vadd.f32 %v2394, %v2753
      %v2755 = vpop.f32.mrf.mxu0
      %v2756 = vpop.f32.mrf.mxu0
      %2757 = vdwg.mxu0
      %2758 = vmatprep.subr.bf16.mxu0 %v2636
      %2759 = vmatpush1.bf16.msra.mxu0 %v2635
      %2760 = vmatprep.subr.bf16.mxu0 %v2634
      %2761 = vmatpush1.bf16.msra.mxu0 %v2633
      %2762 = vmatprep.subr.bf16.mxu0 %v2632
      %2763 = vmatpush1.bf16.msra.mxu0 %v2631
      %2764 = vmatprep.subr.bf16.mxu0 %v2630
      %2765 = vmatpush1.bf16.msra.mxu0 %v2629
      %2766 = vmatprep.subr.bf16.mxu0 %v2628
      %2767 = vmatpush1.bf16.msra.mxu0 %v2627
      %2768 = vmatprep.subr.bf16.mxu0 %v2626
      %2769 = vmatpush1.bf16.msra.mxu0 %v2625
      %2770 = vmatprep.subr.bf16.mxu0 %v2624
      %2771 = vmatpush1.bf16.msra.mxu0 %v2623
      %2772 = vmatprep.subr.bf16.mxu0 %v2622
      %2773 = vmatpush1.bf16.msra.mxu0 %v2621
      %2774 = vmatprep.subr.bf16.mxu0 %v2652
      %2775 = vmatpush2.bf16.msra.mxu0 %v2651
      %2776 = vmatprep.subr.bf16.mxu0 %v2650
      %2777 = vmatpush2.bf16.msra.mxu0 %v2649
      %2778 = vmatprep.subr.bf16.mxu0 %v2648
      %2779 = vmatpush2.bf16.msra.mxu0 %v2647
      %2780 = vmatprep.subr.bf16.mxu0 %v2646
      %2781 = vmatpush2.bf16.msra.mxu0 %v2645
      %2782 = vmatprep.subr.bf16.mxu0 %v2644
      %2783 = vmatpush2.bf16.msra.mxu0 %v2643
      %2784 = vmatprep.subr.bf16.mxu0 %v2642
      %2785 = vmatpush2.bf16.msra.mxu0 %v2641
      %2786 = vmatprep.subr.bf16.mxu0 %v2640
      %2787 = vmatpush2.bf16.msra.mxu0 %v2639
      %2788 = vmatprep.subr.bf16.mxu0 %v2638
      %2789 = vmatpush2.bf16.msra.mxu0 %v2637
      %2790 = vmatprep.mubr.bf16.mxu0 %v2320
      %2791 = vmatmul.mubr.bf16.gmra.mxu0 %v2319
      %v2792 = vpop.f32.mrf.mxu0
      %v2793 = vadd.f32 %v2752, %v2792
      %v2794 = vpop.f32.mrf.mxu0
      %v2795 = vadd.f32 %v2754, %v2794
      %v2796 = vpop.f32.mrf.mxu0
      %v2797 = vpop.f32.mrf.mxu0
      %2798 = vdwg.mxu0
      %v2799 = vmax.f32 %v2793, 0.0
      %v2800 = vmax.f32 %v2795, 0.0
      %v2801 = vld [vmem:[%s7] sm:$0x3]
      %v2802 = vunpack.c.l.bf16 %v2801
      %v2804 = vlaneseq
      %v2805 = vshrl.u32 %v2804, 7
      %v2806 = vsub.s32 0, %v2805
      %v2807 = vrot.slane %v2802, %v2806
      %v2808 = vlaneseq
      %v2809 = vshrl.u32 %v2808, 7
      %v2810 = vsub.s32 2, %v2809
      %v2811 = vrot.slane %v2802, %v2810
      %v2814 = vlaneseq
      %v2815 = vshrl.u32 %v2814, 7
      %v2816 = vsub.s32 0, %v2815
      %v2817 = vrot.slane %v2807, %v2816
      %v2818 = vlaneseq
      %v2819 = vshrl.u32 %v2818, 7
      %v2820 = vsub.s32 0, %v2819
      %v2821 = vrot.slane %v2811, %v2820
      %v2822 = vmul.f32 %v2799, %v2817
      %v2823 = vmul.f32 %v2800, %v2821
      %v2824 = vadd.f32 %v2822, %v2823
      %2825 = vadd.xlane.f32.xlu0 %v2824
      %v2826 = vpop.xlane.xlu0 %2825
      %v2827 = vld [vmem:[#allocation3] sm:$0x1]
      %2829 = vset.pattern.permute.xlu0 0
      %2830 = vperm.xlu0 %2829, %v2827
      %v2831 = vpop.permute.xlu0 %2830
      %v2833 = vlaneseq
      %v2834 = vshrl.u32 %v2833, 7
      %v2835 = vsub.s32 0, %v2834
      %v2836 = vrot.slane %v2831, %v2835
      %v2837 = vadd.f32 %v2826, %v2836
      %v2839 = vlaneseq
      %v2840 = vand.u32 %v2839, 127
      %v2841 = vlaneseq
      %v2842 = vshrl.u32 %v2841, 7
      %v2843 = vsub.s32 %v2840, %v2842
      %v2844 = vrot.slane %v2837, %v2843
      %vm2846 = vcmask 57344
      %2847 = vst.msk [vmem:[#allocation13] sm:$0x1] %vm2846, %v2844
    $region65: #{tpu_custom_call.1} parent=1 // pred_fallthru
      _
    // Predicated region
    $region66: #{tpu_custom_call.1} parent=1 // pred_check
      _
    $region67: #{tpu_custom_call.1} parent=1 // pred_check_branch
      %2849 = sbr.rel (0) target = $region69
    $region68: #{tpu_custom_call.1} parent=1 // pred_region
      %s2851 = ssub.s32 16, 16
      %2852 = vsyncadd [#allocation6], %s2851
      %s2854 = sshll.u32 [#allocation13], 4
      %s2855 = int_to_ptr.vmem [resolvable:$true] %s2854
      %2857 = dma.vmem_to_hbm [thread:$0]  %s2855, 16, %s9, [#allocation6]
    $region69: #{tpu_custom_call.1} parent=1 // pred_fallthru
      _
    // Predicated region
    $region70: #{tpu_custom_call.1} parent=1 // pred_check
      _
    $region71: #{tpu_custom_call.1} parent=1 // pred_check_branch
      %2859 = sbr.rel (0) target = $region73
    $region72: #{tpu_custom_call.1} parent=1 // pred_region
      %2860 = dma.done [#allocation6], 16
    $region73: #{tpu_custom_call.1} parent=1 // pred_fallthru
      _
    %2861 = vsyncpa [#allocation5], 1
    %2862 = vsyncpa [#allocation8], 1
    %2863 = vsyncpa [#allocation11], 1
    %2864 = vsyncpa [#allocation6], 1

</llo_original>
